<compile_context>
chip_gen: v5e
topology: v5e:2x2
jax: 0.10.0
libtpu: 0.0.40
codegen_flags: <defaults>
</compile_context>

<pallas_src>
import functools

import numpy as np
import jax
import jax.numpy as jnp
from jax.experimental import pallas as pl
from jax.experimental.pallas import tpu as pltpu

SAMPLE_RATE = 16000
FRAME_LEN = 400          # 25 ms  (also the trimmed contraction dim K)
FRAME_SHIFT = 160        # 10 ms
PADDED_LEN = 512         # FFT size (next power of two of 400)
NUM_MEL = 80
MEL_PAD = 128            # output padded to a full 128-lane slab (unmasked vst)
NUM_BINS = 256           # kaldi mel banks only use FFT bins [0, 256)
PREEMPH = 0.97
LOG_EPS = float(np.finfo(np.float32).eps)


# ----------------------------------------------------------------------------
# Host-side constant construction (float64, rounded once to bf16 at the end)
# ----------------------------------------------------------------------------
def _povey_window():
    n = np.arange(FRAME_LEN, dtype=np.float64)
    return (0.5 - 0.5 * np.cos(2.0 * np.pi * n / (FRAME_LEN - 1))) ** 0.85


def _preprocess_matrix():
    """(400, 400) linear map P s.t. preprocessed_frame = frame @ P.

    Folds: remove-DC (mean over the 400 samples), pre-emphasis
    (z[0] = x[0] - 0.97*x[0], z[n] = x[n] - 0.97*x[n-1]) and the Povey window.
    """
    w = _povey_window()
    P = np.zeros((FRAME_LEN, FRAME_LEN), np.float64)
    for n in range(FRAME_LEN):
        prev = n - 1 if n > 0 else 0            # kaldi convention for n == 0
        P[n, n] += 1.0
        P[prev, n] -= PREEMPH
    # DC removal contributes -(1 - PREEMPH) * mean(x) to every output sample
    P -= (1.0 - PREEMPH) / FRAME_LEN
    # Povey window applied on the output index
    P *= w[None, :]
    return P


def _dft_weight():
    """(400, 512) weight = P @ [cos | -sin] for the first 256 real-DFT bins.

    Rows 400..511 of the zero-padded frame are identically zero, so the
    contraction dimension is trimmed to 400 (review #2).
    """
    n = np.arange(FRAME_LEN, dtype=np.float64)[:, None]
    k = np.arange(NUM_BINS, dtype=np.float64)[None, :]
    ang = 2.0 * np.pi * n * k / PADDED_LEN
    dft = np.concatenate([np.cos(ang), -np.sin(ang)], axis=1)   # (400, 512)
    return _preprocess_matrix() @ dft


def _mel_banks():
    def mel(f):
        return 1127.0 * np.log(1.0 + f / 700.0)

    low, high = 20.0, SAMPLE_RATE / 2.0
    mel_low, mel_high = mel(low), mel(high)
    delta = (mel_high - mel_low) / (NUM_MEL + 1)
    fft_bin_width = SAMPLE_RATE / PADDED_LEN
    banks = np.zeros((NUM_BINS, NUM_MEL), np.float64)
    for m in range(NUM_MEL):
        left = mel_low + m * delta
        center = left + delta
        right = center + delta
        for k in range(NUM_BINS):
            mk = mel(fft_bin_width * k)
            if left < mk < right:
                if mk <= center:
                    banks[k, m] = (mk - left) / (center - left)
                else:
                    banks[k, m] = (right - mk) / (right - center)
    return banks


def _mel_weight():
    out = np.zeros((NUM_BINS, MEL_PAD), np.float64)
    out[:, :NUM_MEL] = _mel_banks()
    return out


# ----------------------------------------------------------------------------
# Pallas kernel: TF frames -> TF log-mel rows (matmul -> power -> matmul -> log)
# ----------------------------------------------------------------------------
def fbank_kernel(frames_ref, dft_ref, mel_ref, out_ref):
    x = frames_ref[...]                                        # (TF, 400) bf16
    # folded preprocessing + real DFT in one bf16 MXU matmul: [re | im]
    spec = jnp.dot(x, dft_ref[...],
                   preferred_element_type=jnp.float32)         # (TF, 512) f32
    re = spec[:, :NUM_BINS]
    im = spec[:, NUM_BINS:]
    power = re * re + im * im                                  # (TF, 256) f32
    mel_e = jnp.dot(power.astype(jnp.bfloat16), mel_ref[...],
                    preferred_element_type=jnp.float32)        # (TF, 128) f32
    out_ref[...] = jnp.log(jnp.maximum(mel_e, LOG_EPS))


@functools.lru_cache(maxsize=None)
def _build_fbank_call(f_pad: int, tf: int):
    call = pl.pallas_call(
        fbank_kernel,
        out_shape=jax.ShapeDtypeStruct((f_pad, MEL_PAD), jnp.float32),
        grid_spec=pltpu.PrefetchScalarGridSpec(
            num_scalar_prefetch=0,
            grid=(f_pad // tf,),
            in_specs=[
                pl.BlockSpec((tf, FRAME_LEN), lambda i: (i, 0)),
                # constant weights (index_map fixed -> DMA'd once).  Skipping
                # pl.Buffered(1): total VMEM footprint is already < 2 MiB.
                pl.BlockSpec((FRAME_LEN, 2 * NUM_BINS), lambda i: (0, 0)),
                pl.BlockSpec((NUM_BINS, MEL_PAD), lambda i: (0, 0)),
            ],
            out_specs=pl.BlockSpec((tf, MEL_PAD), lambda i: (i, 0)),
        ),
        compiler_params=pltpu.CompilerParams(
            dimension_semantics=("parallel",)),
    )
    return jax.jit(call)


# ----------------------------------------------------------------------------
# Wrapper (framing / batching glue)
# ----------------------------------------------------------------------------
def _extract_frames(wave):
    num_frames = 1 + (wave.shape[0] - FRAME_LEN) // FRAME_SHIFT  # snip_edges
    idx = (np.arange(num_frames)[:, None] * FRAME_SHIFT
           + np.arange(FRAME_LEN)[None, :])
    return wave[idx], num_frames                                 # (F, 400) f32


def _choose_tf(total_frames: int) -> int:
    # 256 fills the 256-wide MXU (v6e/v7x) and amortizes the per-step overhead,
    # but keep >= 2 grid steps when possible so v7x's second TensorCore is used.
    return 256 if total_frames >= 512 else 128


def _fbank_batched(waves, dft_w, mel_w):
    frames_list, counts = [], []
    for w in waves:
        f, n = _extract_frames(w)
        frames_list.append(f)
        counts.append(n)
    total = sum(counts)
    tf = _choose_tf(total)
    f_pad = pl.cdiv(total, tf) * tf                 # bucketed -> bounded compiles
    frames = jnp.concatenate(frames_list, axis=0)   # (total, 400) f32
    frames = jnp.pad(frames, ((0, f_pad - total), (0, 0)))
    frames = frames.astype(jnp.bfloat16)            # halves frames HBM/DMA bytes
    # TODO(synk): build the frame matrix inside the kernel from the raw waveform
    # (hop-row reshape + shifted matmuls or manual DMA) to remove this ~2.5x
    # HBM materialization pass entirely (review #5).

    out = _build_fbank_call(f_pad, tf)(frames, dft_w, mel_w)

    feats, off = [], 0
    for n in counts:
        feats.append(out[off:off + n, :NUM_MEL])
        off += n
    return feats


class FbankPallas:
    """JAX/Pallas equivalent of the PyTorch `Fbank(torch.nn.Module)` forward."""

    def __init__(self):
        # bf16 operands feed the MXU natively on v5e/v6e/v7x; accumulation stays
        # f32 via preferred_element_type inside the kernel (review #1).
        self.dft = jnp.asarray(_dft_weight(), dtype=jnp.bfloat16)   # (400, 512)
        self.mel = jnp.asarray(_mel_weight(), dtype=jnp.bfloat16)   # (256, 128)

    def __call__(self, waves):
        # forward(waves: List[Tensor]) -> List[Tensor] of shape (num_frames, 80)
        return _fbank_batched(list(waves), self.dft, self.mel)


# ----------------------------------------------------------------------------
# References for correctness checks
# ----------------------------------------------------------------------------
def _reference_fbank(wave):
    """Full-f32 unfolded path (XLA rfft) -- true kaldifeat semantics."""
    fr, _ = _extract_frames(wave)
    fr = fr.astype(jnp.float32)
    fr = fr - jnp.mean(fr, axis=-1, keepdims=True)
    prev = jnp.concatenate([fr[:, :1], fr[:, :-1]], axis=-1)
    fr = fr - PREEMPH * prev
    fr = fr * jnp.asarray(_povey_window(), jnp.float32)[None, :]
    fr = jnp.pad(fr, ((0, 0), (0, PADDED_LEN - FRAME_LEN)))
    spec = jnp.fft.rfft(fr, axis=-1)
    power = spec.real ** 2 + spec.imag ** 2
    mel_e = power[:, :NUM_BINS] @ jnp.asarray(_mel_banks(), jnp.float32)
    return jnp.log(jnp.maximum(mel_e, LOG_EPS))


def _reference_quantized(wave, dft_w, mel_w):
    """Same math as the Pallas kernel (bf16 operands, f32 accumulate) via XLA."""
    fr, _ = _extract_frames(wave)
    spec = jnp.dot(fr.astype(jnp.bfloat16), dft_w,
                   preferred_element_type=jnp.float32)
    power = spec[:, :NUM_BINS] ** 2 + spec[:, NUM_BINS:] ** 2
    mel_e = jnp.dot(power.astype(jnp.bfloat16), mel_w,
                    preferred_element_type=jnp.float32)
    return jnp.log(jnp.maximum(mel_e, LOG_EPS))[:, :NUM_MEL]


if __name__ == "__main__":
    key = jax.random.PRNGKey(0)
    k0, k1 = jax.random.split(key)
    # two waveforms of different (small) lengths, 16 kHz mono float32
    wave0 = jax.random.normal(k0, (3200,), dtype=jnp.float32)   # 0.2 s   -> 18 frames
    wave1 = jax.random.normal(k1, (2000,), dtype=jnp.float32)   # 0.125 s -> 11 frames

    fbank = FbankPallas()
    feats = fbank([wave0, wave1])
    feats = [jax.block_until_ready(f) for f in feats]

    assert feats[0].shape == (18, NUM_MEL), feats[0].shape
    assert feats[1].shape == (11, NUM_MEL), feats[1].shape
    assert all(bool(jnp.all(jnp.isfinite(f))) for f in feats)

    # 1) Kernel-mechanics check: identical math (bf16 operands, f32 accumulation)
    #    computed through plain XLA ops must match tightly.
    for w, f in zip([wave0, wave1], feats):
        ref_q = np.asarray(_reference_quantized(w, fbank.dft, fbank.mel))
        np.testing.assert_allclose(np.asarray(f), ref_q, rtol=5e-3, atol=5e-3)

    # 2) Semantics check vs the full-f32 rfft reference.  Compared in the
    #    mel-energy domain so the deliberate bf16 quantization of the near-silent
    #    lowest bins (pre-emphasis suppresses <60 Hz) does not dominate the
    #    log-domain error.
    for w, f in zip([wave0, wave1], feats):
        ref = np.asarray(_reference_fbank(w))
        np.testing.assert_allclose(np.exp(np.asarray(f)), np.exp(ref),
                                   rtol=0.08, atol=0.25)

    print("KERNEL_OK")
</pallas_src>

<mosaic_0001>
module attributes {stable_mosaic.version = 11 : i64} {
  func.func @fbank_kernel(%arg0: i32, %arg1: memref<128x400xbf16, #tpu.memory_space<vmem>>, %arg2: memref<400x512xbf16, #tpu.memory_space<vmem>>, %arg3: memref<256x128xbf16, #tpu.memory_space<vmem>>, %arg4: memref<128x128xf32, #tpu.memory_space<vmem>>) attributes {dimension_semantics = [#tpu.dimension_semantics<parallel>], iteration_bounds = array<i64: 1>, scalar_prefetch = 0 : i64, scratch_operands = 0 : i64, tpu.core_type = #tpu.core_type<tc>, window_params = [{transform_indices = @transform_0, window_bounds = array<i64: 128, 400>}, {pipeline_mode = #tpu.pipeline_mode<synchronous>, transform_indices = @transform_1, window_bounds = array<i64: 400, 512>}, {pipeline_mode = #tpu.pipeline_mode<synchronous>, transform_indices = @transform_2, window_bounds = array<i64: 256, 128>}, {transform_indices = @transform_3, window_bounds = array<i64: 128, 128>}]} {
    %c0 = arith.constant 0 : index
    %c0_0 = arith.constant 0 : index
    %0 = vector.load %arg1[%c0, %c0_0] : memref<128x400xbf16, #tpu.memory_space<vmem>>, vector<128x400xbf16>
    %c0_1 = arith.constant 0 : index
    %c0_2 = arith.constant 0 : index
    %1 = vector.load %arg2[%c0_1, %c0_2] : memref<400x512xbf16, #tpu.memory_space<vmem>>, vector<400x512xbf16>
    %cst = arith.constant dense<0.000000e+00> : vector<128x512xf32>
    %2 = tpu.matmul %0, %1, %cst {dimension_numbers = #tpu.dot_dimension_numbers<[1], [0], [0], [1], [0, 0, 1, 1], [], []>} : vector<128x400xbf16>, vector<400x512xbf16>, vector<128x512xf32> -> vector<128x512xf32>
    %3 = vector.extract_strided_slice %2 {offsets = [0, 0], sizes = [128, 256], strides = [1, 1]} : vector<128x512xf32> to vector<128x256xf32>
    %4 = vector.extract_strided_slice %2 {offsets = [0, 256], sizes = [128, 256], strides = [1, 1]} : vector<128x512xf32> to vector<128x256xf32>
    %5 = arith.mulf %3, %3 : vector<128x256xf32>
    %6 = arith.mulf %4, %4 : vector<128x256xf32>
    %7 = arith.addf %5, %6 : vector<128x256xf32>
    %8 = arith.truncf %7 : vector<128x256xf32> to vector<128x256xbf16>
    %c0_3 = arith.constant 0 : index
    %c0_4 = arith.constant 0 : index
    %9 = vector.load %arg3[%c0_3, %c0_4] : memref<256x128xbf16, #tpu.memory_space<vmem>>, vector<256x128xbf16>
    %cst_5 = arith.constant dense<0.000000e+00> : vector<128x128xf32>
    %10 = tpu.matmul %8, %9, %cst_5 {dimension_numbers = #tpu.dot_dimension_numbers<[1], [0], [0], [1], [0, 0, 1, 1], [], []>} : vector<128x256xbf16>, vector<256x128xbf16>, vector<128x128xf32> -> vector<128x128xf32>
    %cst_6 = arith.constant 1.1920929E-7 : f32
    %11 = vector.broadcast %cst_6 : f32 to vector<128x128xf32>
    %12 = arith.maximumf %10, %11 : vector<128x128xf32>
    %13 = math.log %12 : vector<128x128xf32>
    %c0_7 = arith.constant 0 : index
    %c0_8 = arith.constant 0 : index
    %14 = vector.load %arg4[%c0_7, %c0_8] : memref<128x128xf32, #tpu.memory_space<vmem>>, vector<128x128xf32>
    tpu.vector_store %arg4[%c0_7, %c0_8], %13 {strides = array<i32>} : memref<128x128xf32, #tpu.memory_space<vmem>>, vector<128x128xf32>,
    return
  }
  func.func @transform_0(%arg0: i32) -> (i32, i32) {
    %c0_i32 = arith.constant 0 : i32
    %c0_i32_0 = arith.constant 0 : i32
    return %arg0, %c0_i32 : i32, i32
  }
  func.func @transform_1(%arg0: i32) -> (i32, i32) {
    %c0_i32 = arith.constant 0 : i32
    %c0_i32_0 = arith.constant 0 : i32
    %c0_i32_1 = arith.constant 0 : i32
    return %c0_i32, %c0_i32_0 : i32, i32
  }
  func.func @transform_2(%arg0: i32) -> (i32, i32) {
    %c0_i32 = arith.constant 0 : i32
    %c0_i32_0 = arith.constant 0 : i32
    %c0_i32_1 = arith.constant 0 : i32
    return %c0_i32, %c0_i32_0 : i32, i32
  }
  func.func @transform_3(%arg0: i32) -> (i32, i32) {
    %c0_i32 = arith.constant 0 : i32
    %c0_i32_0 = arith.constant 0 : i32
    return %arg0, %c0_i32 : i32, i32
  }
}

</mosaic_0001>

<llo_original>
// kernel: tpu_custom_call.1
$region0: #{tpu_custom_call.1}
  #allocation0 [shape = 'u32[]', space=smem, size = 0x4, offset = 0x4, fixed_abs, tag = 'smem constant byte address 0x4 - core index']
  #allocation1 [shape = 'u32[72,128]{1,0:T(1,128)}', space=vmem, size = 0x9000, scoped, tag = 'internal scratch']
  %s0 = inlined_call_operand.vmem [shape: bf16[128,400], index: 0, kind: input, shape index: {}]
  %s1 = inlined_call_operand.hbm [shape: bf16[400,512], index: 1, kind: input, shape index: {}]
  %s2 = inlined_call_operand.vmem [shape: bf16[256,128], index: 2, kind: input, shape index: {}]
  %s3 = inlined_call_operand.hbm [shape: f32[128,128], index: 3, kind: output, shape index: {}]
  %s4 = sld [smem:[#allocation0]]
  $region26: #{tpu_custom_call.1} parent=0
    _
  %s6 = ssub.s32 1, %s4
  %s7 = scalar_select 0, %s6, %s4
  $region1: #{tpu_custom_call.1} parent=0
    #allocation2 [shape = 'u8[409600]{0}', space=vmem, size = 0x64000, scoped, tag = 'input window, operand 1, single buffered']
    #allocation3 [shape = 's32[1]{0}', space=sflag, size = 0x4, scoped, tag = 'scoped memory for tpu_custom_call.1']
    #allocation4 [shape = 's32[1]{0}', space=sflag, size = 0x4, scoped, tag = 'scoped memory for tpu_custom_call.1']
    #allocation5 [shape = 'u8[65536]{0}', space=vmem, size = 0x10000, scoped, tag = 'output window, operand 0, single buffered']
    %8 = vsyncpa [#allocation3], 0
    %9 = vsyncpa [#allocation4], 0
    // Predicated region
    $region2: #{tpu_custom_call.1} parent=1 // pred_check
      _
    $region3: #{tpu_custom_call.1} parent=1 // pred_check_branch
      %11 = sbr.rel (0) target = $region5
    $region4: #{tpu_custom_call.1} parent=1 // pred_region
      _
    $region5: #{tpu_custom_call.1} parent=1 // pred_fallthru
      _
    // Predicated region
    $region6: #{tpu_custom_call.1} parent=1 // pred_check
      _
    $region7: #{tpu_custom_call.1} parent=1 // pred_check_branch
      %13 = sbr.rel (0) target = $region9
    $region8: #{tpu_custom_call.1} parent=1 // pred_region
      %15 = vsyncadd [#allocation3], 0
      %s16 = sshll.u32 %s1, 4
      %s17 = int_to_ptr.hbm [resolvable:$true] %s16
      %s18 = sshll.u32 [#allocation2], 4
      %s19 = int_to_ptr.vmem [resolvable:$true] %s18
      %24 = dma.hbm_to_vmem [thread:$0]  %s17, 12800, %s19, [#allocation3], 256, 256, 16
    $region9: #{tpu_custom_call.1} parent=1 // pred_fallthru
      _
    // Predicated region
    $region10: #{tpu_custom_call.1} parent=1 // pred_check
      _
    $region11: #{tpu_custom_call.1} parent=1 // pred_check_branch
      %26 = sbr.rel (0) target = $region13
    $region12: #{tpu_custom_call.1} parent=1 // pred_region
      _
    $region13: #{tpu_custom_call.1} parent=1 // pred_fallthru
      _
    // Predicated region
    $region14: #{tpu_custom_call.1} parent=1 // pred_check
      _
    $region15: #{tpu_custom_call.1} parent=1 // pred_check_branch
      %28 = sbr.rel (0) target = $region17
    $region16: #{tpu_custom_call.1} parent=1 // pred_region
      %30 = dma.done [#allocation3], 12800
    $region17: #{tpu_custom_call.1} parent=1 // pred_fallthru
      _
    %v32 = vld [vmem:[%s0] sm:$0xff]
    %v33 = vld [vmem:[%s0 + $0x8] sm:$0xff]
    %v34 = vld [vmem:[%s0 + $0x10] sm:$0xff]
    %v35 = vld [vmem:[%s0 + $0x18] sm:$0xff]
    %v36 = vld [vmem:[%s0 + $0x20] sm:$0xff]
    %v37 = vld [vmem:[%s0 + $0x28] sm:$0xff]
    %v38 = vld [vmem:[%s0 + $0x30] sm:$0xff]
    %v39 = vld [vmem:[%s0 + $0x38] sm:$0xff]
    %v40 = vld [vmem:[%s0 + $0x40] sm:$0xff]
    %v41 = vld [vmem:[%s0 + $0x48] sm:$0xff]
    %v42 = vld [vmem:[%s0 + $0x50] sm:$0xff]
    %v43 = vld [vmem:[%s0 + $0x58] sm:$0xff]
    %v44 = vld [vmem:[%s0 + $0x60] sm:$0xff]
    %v45 = vld [vmem:[%s0 + $0x68] sm:$0xff]
    %v46 = vld [vmem:[%s0 + $0x70] sm:$0xff]
    %v47 = vld [vmem:[%s0 + $0x78] sm:$0xff]
    %v48 = vld [vmem:[%s0 + $0x80] sm:$0xff]
    %v49 = vld [vmem:[%s0 + $0x88] sm:$0xff]
    %v50 = vld [vmem:[%s0 + $0x90] sm:$0xff]
    %v51 = vld [vmem:[%s0 + $0x98] sm:$0xff]
    %v52 = vld [vmem:[%s0 + $0xa0] sm:$0xff]
    %v53 = vld [vmem:[%s0 + $0xa8] sm:$0xff]
    %v54 = vld [vmem:[%s0 + $0xb0] sm:$0xff]
    %v55 = vld [vmem:[%s0 + $0xb8] sm:$0xff]
    %v56 = vld [vmem:[%s0 + $0xc0] sm:$0xff]
    %v57 = vld [vmem:[%s0 + $0xc8] sm:$0xff]
    %v58 = vld [vmem:[%s0 + $0xd0] sm:$0xff]
    %v59 = vld [vmem:[%s0 + $0xd8] sm:$0xff]
    %v60 = vld [vmem:[%s0 + $0xe0] sm:$0xff]
    %v61 = vld [vmem:[%s0 + $0xe8] sm:$0xff]
    %v62 = vld [vmem:[%s0 + $0xf0] sm:$0xff]
    %v63 = vld [vmem:[%s0 + $0xf8] sm:$0xff]
    %v64 = vld [vmem:[#allocation2] sm:$0xff]
    %v65 = vld [vmem:[#allocation2 + $0x8] sm:$0xff]
    %v66 = vld [vmem:[#allocation2 + $0x10] sm:$0xff]
    %v67 = vld [vmem:[#allocation2 + $0x18] sm:$0xff]
    %v68 = vld [vmem:[#allocation2 + $0x20] sm:$0xff]
    %v69 = vld [vmem:[#allocation2 + $0x28] sm:$0xff]
    %v70 = vld [vmem:[#allocation2 + $0x30] sm:$0xff]
    %v71 = vld [vmem:[#allocation2 + $0x38] sm:$0xff]
    %v72 = vld [vmem:[#allocation2 + $0x40] sm:$0xff]
    %v73 = vld [vmem:[#allocation2 + $0x48] sm:$0xff]
    %v74 = vld [vmem:[#allocation2 + $0x50] sm:$0xff]
    %v75 = vld [vmem:[#allocation2 + $0x58] sm:$0xff]
    %v76 = vld [vmem:[#allocation2 + $0x60] sm:$0xff]
    %v77 = vld [vmem:[#allocation2 + $0x68] sm:$0xff]
    %v78 = vld [vmem:[#allocation2 + $0x70] sm:$0xff]
    %v79 = vld [vmem:[#allocation2 + $0x78] sm:$0xff]
    %v80 = vld [vmem:[#allocation2 + $0x80] sm:$0xff]
    %v81 = vld [vmem:[#allocation2 + $0x88] sm:$0xff]
    %v82 = vld [vmem:[#allocation2 + $0x90] sm:$0xff]
    %v83 = vld [vmem:[#allocation2 + $0x98] sm:$0xff]
    %v84 = vld [vmem:[#allocation2 + $0xa0] sm:$0xff]
    %v85 = vld [vmem:[#allocation2 + $0xa8] sm:$0xff]
    %v86 = vld [vmem:[#allocation2 + $0xb0] sm:$0xff]
    %v87 = vld [vmem:[#allocation2 + $0xb8] sm:$0xff]
    %v88 = vld [vmem:[#allocation2 + $0xc0] sm:$0xff]
    %v89 = vld [vmem:[#allocation2 + $0xc8] sm:$0xff]
    %v90 = vld [vmem:[#allocation2 + $0xd0] sm:$0xff]
    %v91 = vld [vmem:[#allocation2 + $0xd8] sm:$0xff]
    %v92 = vld [vmem:[#allocation2 + $0xe0] sm:$0xff]
    %v93 = vld [vmem:[#allocation2 + $0xe8] sm:$0xff]
    %v94 = vld [vmem:[#allocation2 + $0xf0] sm:$0xff]
    %v95 = vld [vmem:[#allocation2 + $0xf8] sm:$0xff]
    %v96 = vld [vmem:[#allocation2 + $0x100] sm:$0xff]
    %v97 = vld [vmem:[#allocation2 + $0x108] sm:$0xff]
    %v98 = vld [vmem:[#allocation2 + $0x110] sm:$0xff]
    %v99 = vld [vmem:[#allocation2 + $0x118] sm:$0xff]
    %v100 = vld [vmem:[#allocation2 + $0x120] sm:$0xff]
    %v101 = vld [vmem:[#allocation2 + $0x128] sm:$0xff]
    %v102 = vld [vmem:[#allocation2 + $0x130] sm:$0xff]
    %v103 = vld [vmem:[#allocation2 + $0x138] sm:$0xff]
    %v104 = vld [vmem:[#allocation2 + $0x140] sm:$0xff]
    %v105 = vld [vmem:[#allocation2 + $0x148] sm:$0xff]
    %v106 = vld [vmem:[#allocation2 + $0x150] sm:$0xff]
    %v107 = vld [vmem:[#allocation2 + $0x158] sm:$0xff]
    %v108 = vld [vmem:[#allocation2 + $0x160] sm:$0xff]
    %v109 = vld [vmem:[#allocation2 + $0x168] sm:$0xff]
    %v110 = vld [vmem:[#allocation2 + $0x170] sm:$0xff]
    %v111 = vld [vmem:[#allocation2 + $0x178] sm:$0xff]
    %v112 = vld [vmem:[#allocation2 + $0x180] sm:$0xff]
    %v113 = vld [vmem:[#allocation2 + $0x188] sm:$0xff]
    %v114 = vld [vmem:[#allocation2 + $0x190] sm:$0xff]
    %v115 = vld [vmem:[#allocation2 + $0x198] sm:$0xff]
    %v116 = vld [vmem:[#allocation2 + $0x1a0] sm:$0xff]
    %v117 = vld [vmem:[#allocation2 + $0x1a8] sm:$0xff]
    %v118 = vld [vmem:[#allocation2 + $0x1b0] sm:$0xff]
    %v119 = vld [vmem:[#allocation2 + $0x1b8] sm:$0xff]
    %v120 = vld [vmem:[#allocation2 + $0x1c0] sm:$0xff]
    %v121 = vld [vmem:[#allocation2 + $0x1c8] sm:$0xff]
    %v122 = vld [vmem:[#allocation2 + $0x1d0] sm:$0xff]
    %v123 = vld [vmem:[#allocation2 + $0x1d8] sm:$0xff]
    %v124 = vld [vmem:[#allocation2 + $0x1e0] sm:$0xff]
    %v125 = vld [vmem:[#allocation2 + $0x1e8] sm:$0xff]
    %v126 = vld [vmem:[#allocation2 + $0x1f0] sm:$0xff]
    %v127 = vld [vmem:[#allocation2 + $0x1f8] sm:$0xff]
    %v128 = vld [vmem:[#allocation2 + $0x200] sm:$0xff]
    %v129 = vld [vmem:[#allocation2 + $0x208] sm:$0xff]
    %v130 = vld [vmem:[#allocation2 + $0x210] sm:$0xff]
    %v131 = vld [vmem:[#allocation2 + $0x218] sm:$0xff]
    %v132 = vld [vmem:[#allocation2 + $0x220] sm:$0xff]
    %v133 = vld [vmem:[#allocation2 + $0x228] sm:$0xff]
    %v134 = vld [vmem:[#allocation2 + $0x230] sm:$0xff]
    %v135 = vld [vmem:[#allocation2 + $0x238] sm:$0xff]
    %v136 = vld [vmem:[#allocation2 + $0x240] sm:$0xff]
    %v137 = vld [vmem:[#allocation2 + $0x248] sm:$0xff]
    %v138 = vld [vmem:[#allocation2 + $0x250] sm:$0xff]
    %v139 = vld [vmem:[#allocation2 + $0x258] sm:$0xff]
    %v140 = vld [vmem:[#allocation2 + $0x260] sm:$0xff]
    %v141 = vld [vmem:[#allocation2 + $0x268] sm:$0xff]
    %v142 = vld [vmem:[#allocation2 + $0x270] sm:$0xff]
    %v143 = vld [vmem:[#allocation2 + $0x278] sm:$0xff]
    %v144 = vld [vmem:[#allocation2 + $0x280] sm:$0xff]
    %v145 = vld [vmem:[#allocation2 + $0x288] sm:$0xff]
    %v146 = vld [vmem:[#allocation2 + $0x290] sm:$0xff]
    %v147 = vld [vmem:[#allocation2 + $0x298] sm:$0xff]
    %v148 = vld [vmem:[#allocation2 + $0x2a0] sm:$0xff]
    %v149 = vld [vmem:[#allocation2 + $0x2a8] sm:$0xff]
    %v150 = vld [vmem:[#allocation2 + $0x2b0] sm:$0xff]
    %v151 = vld [vmem:[#allocation2 + $0x2b8] sm:$0xff]
    %v152 = vld [vmem:[#allocation2 + $0x2c0] sm:$0xff]
    %v153 = vld [vmem:[#allocation2 + $0x2c8] sm:$0xff]
    %v154 = vld [vmem:[#allocation2 + $0x2d0] sm:$0xff]
    %v155 = vld [vmem:[#allocation2 + $0x2d8] sm:$0xff]
    %v156 = vld [vmem:[#allocation2 + $0x2e0] sm:$0xff]
    %v157 = vld [vmem:[#allocation2 + $0x2e8] sm:$0xff]
    %v158 = vld [vmem:[#allocation2 + $0x2f0] sm:$0xff]
    %v159 = vld [vmem:[#allocation2 + $0x2f8] sm:$0xff]
    %v160 = vld [vmem:[#allocation2 + $0x300] sm:$0xff]
    %v161 = vld [vmem:[#allocation2 + $0x308] sm:$0xff]
    %v162 = vld [vmem:[#allocation2 + $0x310] sm:$0xff]
    %v163 = vld [vmem:[#allocation2 + $0x318] sm:$0xff]
    %v196 = vunpack.c.l.b16 %v32
    %v197 = vunpack.c.h.b16 %v32
    %v198 = vunpack.c.l.b16 %v33
    %v199 = vunpack.c.h.b16 %v33
    %v200 = vunpack.c.l.b16 %v34
    %v201 = vunpack.c.h.b16 %v34
    %v202 = vunpack.c.l.b16 %v35
    %v203 = vunpack.c.h.b16 %v35
    %v204 = vunpack.c.l.b16 %v36
    %v205 = vunpack.c.h.b16 %v36
    %v206 = vunpack.c.l.b16 %v37
    %v207 = vunpack.c.h.b16 %v37
    %v208 = vunpack.c.l.b16 %v38
    %v209 = vunpack.c.h.b16 %v38
    %v210 = vunpack.c.l.b16 %v39
    %v211 = vunpack.c.h.b16 %v39
    %v212 = vunpack.c.l.b16 %v40
    %v213 = vunpack.c.h.b16 %v40
    %v214 = vunpack.c.l.b16 %v41
    %v215 = vunpack.c.h.b16 %v41
    %v216 = vunpack.c.l.b16 %v42
    %v217 = vunpack.c.h.b16 %v42
    %v218 = vunpack.c.l.b16 %v43
    %v219 = vunpack.c.h.b16 %v43
    %v220 = vunpack.c.l.b16 %v44
    %v221 = vunpack.c.h.b16 %v44
    %v222 = vunpack.c.l.b16 %v45
    %v223 = vunpack.c.h.b16 %v45
    %v224 = vunpack.c.l.b16 %v46
    %v225 = vunpack.c.h.b16 %v46
    %v226 = vunpack.c.l.b16 %v47
    %v227 = vunpack.c.h.b16 %v47
    %v228 = vunpack.c.l.b16 %v48
    %v229 = vunpack.c.h.b16 %v48
    %v230 = vunpack.c.l.b16 %v49
    %v231 = vunpack.c.h.b16 %v49
    %v232 = vunpack.c.l.b16 %v50
    %v233 = vunpack.c.h.b16 %v50
    %v234 = vunpack.c.l.b16 %v51
    %v235 = vunpack.c.h.b16 %v51
    %v236 = vunpack.c.l.b16 %v52
    %v237 = vunpack.c.h.b16 %v52
    %v238 = vunpack.c.l.b16 %v53
    %v239 = vunpack.c.h.b16 %v53
    %v240 = vunpack.c.l.b16 %v54
    %v241 = vunpack.c.h.b16 %v54
    %v242 = vunpack.c.l.b16 %v55
    %v243 = vunpack.c.h.b16 %v55
    %v244 = vunpack.c.l.b16 %v56
    %v245 = vunpack.c.h.b16 %v56
    %v246 = vunpack.c.l.b16 %v57
    %v247 = vunpack.c.h.b16 %v57
    %v248 = vunpack.c.l.b16 %v58
    %v249 = vunpack.c.h.b16 %v58
    %v250 = vunpack.c.l.b16 %v59
    %v251 = vunpack.c.h.b16 %v59
    %v252 = vunpack.c.l.b16 %v60
    %v253 = vunpack.c.h.b16 %v60
    %v254 = vunpack.c.l.b16 %v61
    %v255 = vunpack.c.h.b16 %v61
    %v256 = vunpack.c.l.b16 %v62
    %v257 = vunpack.c.h.b16 %v62
    %v258 = vunpack.c.l.b16 %v63
    %v259 = vunpack.c.h.b16 %v63
    %v260 = vpack.c.b16 %v200, %v196
    %v261 = vpack.c.b16 %v201, %v197
    %v262 = vpack.c.b16 %v202, %v198
    %v263 = vpack.c.b16 %v203, %v199
    %v264 = vpack.c.b16 %v208, %v204
    %v265 = vpack.c.b16 %v209, %v205
    %v266 = vpack.c.b16 %v210, %v206
    %v267 = vpack.c.b16 %v211, %v207
    %v268 = vpack.c.b16 %v216, %v212
    %v269 = vpack.c.b16 %v217, %v213
    %v270 = vpack.c.b16 %v218, %v214
    %v271 = vpack.c.b16 %v219, %v215
    %v272 = vpack.c.b16 %v224, %v220
    %v273 = vpack.c.b16 %v225, %v221
    %v274 = vpack.c.b16 %v226, %v222
    %v275 = vpack.c.b16 %v227, %v223
    %v276 = vpack.c.b16 %v232, %v228
    %v277 = vpack.c.b16 %v233, %v229
    %v278 = vpack.c.b16 %v234, %v230
    %v279 = vpack.c.b16 %v235, %v231
    %v280 = vpack.c.b16 %v240, %v236
    %v281 = vpack.c.b16 %v241, %v237
    %v282 = vpack.c.b16 %v242, %v238
    %v283 = vpack.c.b16 %v243, %v239
    %v284 = vpack.c.b16 %v248, %v244
    %v285 = vpack.c.b16 %v249, %v245
    %v286 = vpack.c.b16 %v250, %v246
    %v287 = vpack.c.b16 %v251, %v247
    %v288 = vpack.c.b16 %v256, %v252
    %v289 = vpack.c.b16 %v257, %v253
    %v290 = vpack.c.b16 %v258, %v254
    %v291 = vpack.c.b16 %v259, %v255
    %v416 = vunpack.c.l.b16 %v64
    %v417 = vunpack.c.h.b16 %v64
    %v418 = vunpack.c.l.b16 %v65
    %v419 = vunpack.c.h.b16 %v65
    %v420 = vunpack.c.l.b16 %v66
    %v421 = vunpack.c.h.b16 %v66
    %v422 = vunpack.c.l.b16 %v67
    %v423 = vunpack.c.h.b16 %v67
    %v424 = vunpack.c.l.b16 %v68
    %v425 = vunpack.c.h.b16 %v68
    %v426 = vunpack.c.l.b16 %v69
    %v427 = vunpack.c.h.b16 %v69
    %v428 = vunpack.c.l.b16 %v70
    %v429 = vunpack.c.h.b16 %v70
    %v430 = vunpack.c.l.b16 %v71
    %v431 = vunpack.c.h.b16 %v71
    %v432 = vunpack.c.l.b16 %v72
    %v433 = vunpack.c.h.b16 %v72
    %v434 = vunpack.c.l.b16 %v73
    %v435 = vunpack.c.h.b16 %v73
    %v436 = vunpack.c.l.b16 %v74
    %v437 = vunpack.c.h.b16 %v74
    %v438 = vunpack.c.l.b16 %v75
    %v439 = vunpack.c.h.b16 %v75
    %v440 = vunpack.c.l.b16 %v76
    %v441 = vunpack.c.h.b16 %v76
    %v442 = vunpack.c.l.b16 %v77
    %v443 = vunpack.c.h.b16 %v77
    %v444 = vunpack.c.l.b16 %v78
    %v445 = vunpack.c.h.b16 %v78
    %v446 = vunpack.c.l.b16 %v79
    %v447 = vunpack.c.h.b16 %v79
    %v448 = vunpack.c.l.b16 %v80
    %v449 = vunpack.c.h.b16 %v80
    %v450 = vunpack.c.l.b16 %v81
    %v451 = vunpack.c.h.b16 %v81
    %v452 = vunpack.c.l.b16 %v82
    %v453 = vunpack.c.h.b16 %v82
    %v454 = vunpack.c.l.b16 %v83
    %v455 = vunpack.c.h.b16 %v83
    %v456 = vunpack.c.l.b16 %v84
    %v457 = vunpack.c.h.b16 %v84
    %v458 = vunpack.c.l.b16 %v85
    %v459 = vunpack.c.h.b16 %v85
    %v460 = vunpack.c.l.b16 %v86
    %v461 = vunpack.c.h.b16 %v86
    %v462 = vunpack.c.l.b16 %v87
    %v463 = vunpack.c.h.b16 %v87
    %v464 = vunpack.c.l.b16 %v88
    %v465 = vunpack.c.h.b16 %v88
    %v466 = vunpack.c.l.b16 %v89
    %v467 = vunpack.c.h.b16 %v89
    %v468 = vunpack.c.l.b16 %v90
    %v469 = vunpack.c.h.b16 %v90
    %v470 = vunpack.c.l.b16 %v91
    %v471 = vunpack.c.h.b16 %v91
    %v472 = vunpack.c.l.b16 %v92
    %v473 = vunpack.c.h.b16 %v92
    %v474 = vunpack.c.l.b16 %v93
    %v475 = vunpack.c.h.b16 %v93
    %v476 = vunpack.c.l.b16 %v94
    %v477 = vunpack.c.h.b16 %v94
    %v478 = vunpack.c.l.b16 %v95
    %v479 = vunpack.c.h.b16 %v95
    %v480 = vunpack.c.l.b16 %v96
    %v481 = vunpack.c.h.b16 %v96
    %v482 = vunpack.c.l.b16 %v97
    %v483 = vunpack.c.h.b16 %v97
    %v484 = vunpack.c.l.b16 %v98
    %v485 = vunpack.c.h.b16 %v98
    %v486 = vunpack.c.l.b16 %v99
    %v487 = vunpack.c.h.b16 %v99
    %v488 = vunpack.c.l.b16 %v100
    %v489 = vunpack.c.h.b16 %v100
    %v490 = vunpack.c.l.b16 %v101
    %v491 = vunpack.c.h.b16 %v101
    %v492 = vunpack.c.l.b16 %v102
    %v493 = vunpack.c.h.b16 %v102
    %v494 = vunpack.c.l.b16 %v103
    %v495 = vunpack.c.h.b16 %v103
    %v496 = vunpack.c.l.b16 %v104
    %v497 = vunpack.c.h.b16 %v104
    %v498 = vunpack.c.l.b16 %v105
    %v499 = vunpack.c.h.b16 %v105
    %v500 = vunpack.c.l.b16 %v106
    %v501 = vunpack.c.h.b16 %v106
    %v502 = vunpack.c.l.b16 %v107
    %v503 = vunpack.c.h.b16 %v107
    %v504 = vunpack.c.l.b16 %v108
    %v505 = vunpack.c.h.b16 %v108
    %v506 = vunpack.c.l.b16 %v109
    %v507 = vunpack.c.h.b16 %v109
    %v508 = vunpack.c.l.b16 %v110
    %v509 = vunpack.c.h.b16 %v110
    %v510 = vunpack.c.l.b16 %v111
    %v511 = vunpack.c.h.b16 %v111
    %v512 = vunpack.c.l.b16 %v112
    %v513 = vunpack.c.h.b16 %v112
    %v514 = vunpack.c.l.b16 %v113
    %v515 = vunpack.c.h.b16 %v113
    %v516 = vunpack.c.l.b16 %v114
    %v517 = vunpack.c.h.b16 %v114
    %v518 = vunpack.c.l.b16 %v115
    %v519 = vunpack.c.h.b16 %v115
    %v520 = vunpack.c.l.b16 %v116
    %v521 = vunpack.c.h.b16 %v116
    %v522 = vunpack.c.l.b16 %v117
    %v523 = vunpack.c.h.b16 %v117
    %v524 = vunpack.c.l.b16 %v118
    %v525 = vunpack.c.h.b16 %v118
    %v526 = vunpack.c.l.b16 %v119
    %v527 = vunpack.c.h.b16 %v119
    %v528 = vunpack.c.l.b16 %v120
    %v529 = vunpack.c.h.b16 %v120
    %v530 = vunpack.c.l.b16 %v121
    %v531 = vunpack.c.h.b16 %v121
    %v532 = vunpack.c.l.b16 %v122
    %v533 = vunpack.c.h.b16 %v122
    %v534 = vunpack.c.l.b16 %v123
    %v535 = vunpack.c.h.b16 %v123
    %v536 = vunpack.c.l.b16 %v124
    %v537 = vunpack.c.h.b16 %v124
    %v538 = vunpack.c.l.b16 %v125
    %v539 = vunpack.c.h.b16 %v125
    %v540 = vunpack.c.l.b16 %v126
    %v541 = vunpack.c.h.b16 %v126
    %v542 = vunpack.c.l.b16 %v127
    %v543 = vunpack.c.h.b16 %v127
    %v544 = vunpack.c.l.b16 %v128
    %v545 = vunpack.c.h.b16 %v128
    %v546 = vunpack.c.l.b16 %v129
    %v547 = vunpack.c.h.b16 %v129
    %v548 = vunpack.c.l.b16 %v130
    %v549 = vunpack.c.h.b16 %v130
    %v550 = vunpack.c.l.b16 %v131
    %v551 = vunpack.c.h.b16 %v131
    %v552 = vunpack.c.l.b16 %v132
    %v553 = vunpack.c.h.b16 %v132
    %v554 = vunpack.c.l.b16 %v133
    %v555 = vunpack.c.h.b16 %v133
    %v556 = vunpack.c.l.b16 %v134
    %v557 = vunpack.c.h.b16 %v134
    %v558 = vunpack.c.l.b16 %v135
    %v559 = vunpack.c.h.b16 %v135
    %v560 = vunpack.c.l.b16 %v136
    %v561 = vunpack.c.h.b16 %v136
    %v562 = vunpack.c.l.b16 %v137
    %v563 = vunpack.c.h.b16 %v137
    %v564 = vunpack.c.l.b16 %v138
    %v565 = vunpack.c.h.b16 %v138
    %v566 = vunpack.c.l.b16 %v139
    %v567 = vunpack.c.h.b16 %v139
    %v568 = vunpack.c.l.b16 %v140
    %v569 = vunpack.c.h.b16 %v140
    %v570 = vunpack.c.l.b16 %v141
    %v571 = vunpack.c.h.b16 %v141
    %v572 = vunpack.c.l.b16 %v142
    %v573 = vunpack.c.h.b16 %v142
    %v574 = vunpack.c.l.b16 %v143
    %v575 = vunpack.c.h.b16 %v143
    %v576 = vunpack.c.l.b16 %v144
    %v577 = vunpack.c.h.b16 %v144
    %v578 = vunpack.c.l.b16 %v145
    %v579 = vunpack.c.h.b16 %v145
    %v580 = vunpack.c.l.b16 %v146
    %v581 = vunpack.c.h.b16 %v146
    %v582 = vunpack.c.l.b16 %v147
    %v583 = vunpack.c.h.b16 %v147
    %v584 = vunpack.c.l.b16 %v148
    %v585 = vunpack.c.h.b16 %v148
    %v586 = vunpack.c.l.b16 %v149
    %v587 = vunpack.c.h.b16 %v149
    %v588 = vunpack.c.l.b16 %v150
    %v589 = vunpack.c.h.b16 %v150
    %v590 = vunpack.c.l.b16 %v151
    %v591 = vunpack.c.h.b16 %v151
    %v592 = vunpack.c.l.b16 %v152
    %v593 = vunpack.c.h.b16 %v152
    %v594 = vunpack.c.l.b16 %v153
    %v595 = vunpack.c.h.b16 %v153
    %v596 = vunpack.c.l.b16 %v154
    %v597 = vunpack.c.h.b16 %v154
    %v598 = vunpack.c.l.b16 %v155
    %v599 = vunpack.c.h.b16 %v155
    %v600 = vunpack.c.l.b16 %v156
    %v601 = vunpack.c.h.b16 %v156
    %v602 = vunpack.c.l.b16 %v157
    %v603 = vunpack.c.h.b16 %v157
    %v604 = vunpack.c.l.b16 %v158
    %v605 = vunpack.c.h.b16 %v158
    %v606 = vunpack.c.l.b16 %v159
    %v607 = vunpack.c.h.b16 %v159
    %v608 = vunpack.c.l.b16 %v160
    %v609 = vunpack.c.h.b16 %v160
    %v610 = vunpack.c.l.b16 %v161
    %v611 = vunpack.c.h.b16 %v161
    %v612 = vunpack.c.l.b16 %v162
    %v613 = vunpack.c.h.b16 %v162
    %v614 = vunpack.c.l.b16 %v163
    %v615 = vunpack.c.h.b16 %v163
    %v616 = vpack.c.b16 %v420, %v416
    %v617 = vpack.c.b16 %v421, %v417
    %v618 = vpack.c.b16 %v422, %v418
    %v619 = vpack.c.b16 %v423, %v419
    %v620 = vpack.c.b16 %v428, %v424
    %v621 = vpack.c.b16 %v429, %v425
    %v622 = vpack.c.b16 %v430, %v426
    %v623 = vpack.c.b16 %v431, %v427
    %v624 = vpack.c.b16 %v436, %v432
    %v625 = vpack.c.b16 %v437, %v433
    %v626 = vpack.c.b16 %v438, %v434
    %v627 = vpack.c.b16 %v439, %v435
    %v628 = vpack.c.b16 %v444, %v440
    %v629 = vpack.c.b16 %v445, %v441
    %v630 = vpack.c.b16 %v446, %v442
    %v631 = vpack.c.b16 %v447, %v443
    %v632 = vpack.c.b16 %v452, %v448
    %v633 = vpack.c.b16 %v453, %v449
    %v634 = vpack.c.b16 %v454, %v450
    %v635 = vpack.c.b16 %v455, %v451
    %v636 = vpack.c.b16 %v460, %v456
    %v637 = vpack.c.b16 %v461, %v457
    %v638 = vpack.c.b16 %v462, %v458
    %v639 = vpack.c.b16 %v463, %v459
    %v640 = vpack.c.b16 %v468, %v464
    %v641 = vpack.c.b16 %v469, %v465
    %v642 = vpack.c.b16 %v470, %v466
    %v643 = vpack.c.b16 %v471, %v467
    %v644 = vpack.c.b16 %v476, %v472
    %v645 = vpack.c.b16 %v477, %v473
    %v646 = vpack.c.b16 %v478, %v474
    %v647 = vpack.c.b16 %v479, %v475
    %v648 = vpack.c.b16 %v484, %v480
    %v649 = vpack.c.b16 %v485, %v481
    %v650 = vpack.c.b16 %v486, %v482
    %v651 = vpack.c.b16 %v487, %v483
    %v652 = vpack.c.b16 %v492, %v488
    %v653 = vpack.c.b16 %v493, %v489
    %v654 = vpack.c.b16 %v494, %v490
    %v655 = vpack.c.b16 %v495, %v491
    %v656 = vpack.c.b16 %v500, %v496
    %v657 = vpack.c.b16 %v501, %v497
    %v658 = vpack.c.b16 %v502, %v498
    %v659 = vpack.c.b16 %v503, %v499
    %v660 = vpack.c.b16 %v508, %v504
    %v661 = vpack.c.b16 %v509, %v505
    %v662 = vpack.c.b16 %v510, %v506
    %v663 = vpack.c.b16 %v511, %v507
    %v664 = vpack.c.b16 %v516, %v512
    %v665 = vpack.c.b16 %v517, %v513
    %v666 = vpack.c.b16 %v518, %v514
    %v667 = vpack.c.b16 %v519, %v515
    %v668 = vpack.c.b16 %v524, %v520
    %v669 = vpack.c.b16 %v525, %v521
    %v670 = vpack.c.b16 %v526, %v522
    %v671 = vpack.c.b16 %v527, %v523
    %v672 = vpack.c.b16 %v532, %v528
    %v673 = vpack.c.b16 %v533, %v529
    %v674 = vpack.c.b16 %v534, %v530
    %v675 = vpack.c.b16 %v535, %v531
    %v676 = vpack.c.b16 %v540, %v536
    %v677 = vpack.c.b16 %v541, %v537
    %v678 = vpack.c.b16 %v542, %v538
    %v679 = vpack.c.b16 %v543, %v539
    %v680 = vpack.c.b16 %v548, %v544
    %v681 = vpack.c.b16 %v549, %v545
    %v682 = vpack.c.b16 %v550, %v546
    %v683 = vpack.c.b16 %v551, %v547
    %v684 = vpack.c.b16 %v556, %v552
    %v685 = vpack.c.b16 %v557, %v553
    %v686 = vpack.c.b16 %v558, %v554
    %v687 = vpack.c.b16 %v559, %v555
    %v688 = vpack.c.b16 %v564, %v560
    %v689 = vpack.c.b16 %v565, %v561
    %v690 = vpack.c.b16 %v566, %v562
    %v691 = vpack.c.b16 %v567, %v563
    %v692 = vpack.c.b16 %v572, %v568
    %v693 = vpack.c.b16 %v573, %v569
    %v694 = vpack.c.b16 %v574, %v570
    %v695 = vpack.c.b16 %v575, %v571
    %v696 = vpack.c.b16 %v580, %v576
    %v697 = vpack.c.b16 %v581, %v577
    %v698 = vpack.c.b16 %v582, %v578
    %v699 = vpack.c.b16 %v583, %v579
    %v700 = vpack.c.b16 %v588, %v584
    %v701 = vpack.c.b16 %v589, %v585
    %v702 = vpack.c.b16 %v590, %v586
    %v703 = vpack.c.b16 %v591, %v587
    %v704 = vpack.c.b16 %v596, %v592
    %v705 = vpack.c.b16 %v597, %v593
    %v706 = vpack.c.b16 %v598, %v594
    %v707 = vpack.c.b16 %v599, %v595
    %v708 = vpack.c.b16 %v604, %v600
    %v709 = vpack.c.b16 %v605, %v601
    %v710 = vpack.c.b16 %v606, %v602
    %v711 = vpack.c.b16 %v607, %v603
    %v712 = vpack.c.b16 %v612, %v608
    %v713 = vpack.c.b16 %v613, %v609
    %v714 = vpack.c.b16 %v614, %v610
    %v715 = vpack.c.b16 %v615, %v611
    %vm816 = vcmask 130048
    %v818 = vsel %vm816, %v263, 0
    %v821 = vsel %vm816, %v267, 0
    %v824 = vsel %vm816, %v271, 0
    %v827 = vsel %vm816, %v275, 0
    %v830 = vsel %vm816, %v279, 0
    %v833 = vsel %vm816, %v283, 0
    %v836 = vsel %vm816, %v287, 0
    %v839 = vsel %vm816, %v291, 0
    %841 = vmatpush.bf16.msra.mxu0 %v644
    %842 = vmatpush.bf16.msra.mxu0 %v640
    %843 = vmatpush.bf16.msra.mxu0 %v636
    %844 = vmatpush.bf16.msra.mxu0 %v632
    %845 = vmatpush.bf16.msra.mxu0 %v628
    %846 = vmatpush.bf16.msra.mxu0 %v624
    %847 = vmatpush.bf16.msra.mxu0 %v620
    %848 = vmatpush.bf16.msra.mxu0 %v616
    %849 = vmatmul.bf16.gmra.mxu0 %v260
    %v850 = vpop.f32.mrf.mxu0
    %v851 = vadd.f32 0.0, %v850
    %v852 = vpop.f32.mrf.mxu0
    %v853 = vadd.f32 0.0, %v852
    %854 = vmatmul.bf16.gmra.mxu0 %v264
    %v855 = vpop.f32.mrf.mxu0
    %v856 = vadd.f32 0.0, %v855
    %v857 = vpop.f32.mrf.mxu0
    %v858 = vadd.f32 0.0, %v857
    %859 = vmatmul.bf16.gmra.mxu0 %v268
    %v860 = vpop.f32.mrf.mxu0
    %v861 = vadd.f32 0.0, %v860
    %v862 = vpop.f32.mrf.mxu0
    %v863 = vadd.f32 0.0, %v862
    %864 = vmatmul.bf16.gmra.mxu0 %v272
    %v865 = vpop.f32.mrf.mxu0
    %v866 = vadd.f32 0.0, %v865
    %v867 = vpop.f32.mrf.mxu0
    %v868 = vadd.f32 0.0, %v867
    %869 = vmatmul.bf16.gmra.mxu0 %v276
    %v870 = vpop.f32.mrf.mxu0
    %v871 = vadd.f32 0.0, %v870
    %v872 = vpop.f32.mrf.mxu0
    %v873 = vadd.f32 0.0, %v872
    %874 = vmatmul.bf16.gmra.mxu0 %v280
    %v875 = vpop.f32.mrf.mxu0
    %v876 = vadd.f32 0.0, %v875
    %v877 = vpop.f32.mrf.mxu0
    %v878 = vadd.f32 0.0, %v877
    %879 = vmatmul.bf16.gmra.mxu0 %v284
    %v880 = vpop.f32.mrf.mxu0
    %v881 = vadd.f32 0.0, %v880
    %v882 = vpop.f32.mrf.mxu0
    %v883 = vadd.f32 0.0, %v882
    %884 = vmatmul.bf16.gmra.mxu0 %v288
    %v885 = vpop.f32.mrf.mxu0
    %v886 = vadd.f32 0.0, %v885
    %v887 = vpop.f32.mrf.mxu0
    %v888 = vadd.f32 0.0, %v887
    %889 = vdwg.mxu0
    %890 = vmatpush.bf16.msra.mxu0 %v676
    %891 = vmatpush.bf16.msra.mxu0 %v672
    %892 = vmatpush.bf16.msra.mxu0 %v668
    %893 = vmatpush.bf16.msra.mxu0 %v664
    %894 = vmatpush.bf16.msra.mxu0 %v660
    %895 = vmatpush.bf16.msra.mxu0 %v656
    %896 = vmatpush.bf16.msra.mxu0 %v652
    %897 = vmatpush.bf16.msra.mxu0 %v648
    %898 = vmatmul.bf16.gmra.mxu0 %v261
    %v899 = vpop.f32.mrf.mxu0
    %v900 = vadd.f32 %v851, %v899
    %v901 = vpop.f32.mrf.mxu0
    %v902 = vadd.f32 %v853, %v901
    %903 = vmatmul.bf16.gmra.mxu0 %v265
    %v904 = vpop.f32.mrf.mxu0
    %v905 = vadd.f32 %v856, %v904
    %v906 = vpop.f32.mrf.mxu0
    %v907 = vadd.f32 %v858, %v906
    %908 = vmatmul.bf16.gmra.mxu0 %v269
    %v909 = vpop.f32.mrf.mxu0
    %v910 = vadd.f32 %v861, %v909
    %v911 = vpop.f32.mrf.mxu0
    %v912 = vadd.f32 %v863, %v911
    %913 = vmatmul.bf16.gmra.mxu0 %v273
    %v914 = vpop.f32.mrf.mxu0
    %v915 = vadd.f32 %v866, %v914
    %v916 = vpop.f32.mrf.mxu0
    %v917 = vadd.f32 %v868, %v916
    %918 = vmatmul.bf16.gmra.mxu0 %v277
    %v919 = vpop.f32.mrf.mxu0
    %v920 = vadd.f32 %v871, %v919
    %v921 = vpop.f32.mrf.mxu0
    %v922 = vadd.f32 %v873, %v921
    %923 = vmatmul.bf16.gmra.mxu0 %v281
    %v924 = vpop.f32.mrf.mxu0
    %v925 = vadd.f32 %v876, %v924
    %v926 = vpop.f32.mrf.mxu0
    %v927 = vadd.f32 %v878, %v926
    %928 = vmatmul.bf16.gmra.mxu0 %v285
    %v929 = vpop.f32.mrf.mxu0
    %v930 = vadd.f32 %v881, %v929
    %v931 = vpop.f32.mrf.mxu0
    %v932 = vadd.f32 %v883, %v931
    %933 = vmatmul.bf16.gmra.mxu0 %v289
    %v934 = vpop.f32.mrf.mxu0
    %v935 = vadd.f32 %v886, %v934
    %v936 = vpop.f32.mrf.mxu0
    %v937 = vadd.f32 %v888, %v936
    %938 = vdwg.mxu0
    %939 = vmatpush.bf16.msra.mxu0 %v708
    %940 = vmatpush.bf16.msra.mxu0 %v704
    %941 = vmatpush.bf16.msra.mxu0 %v700
    %942 = vmatpush.bf16.msra.mxu0 %v696
    %943 = vmatpush.bf16.msra.mxu0 %v692
    %944 = vmatpush.bf16.msra.mxu0 %v688
    %945 = vmatpush.bf16.msra.mxu0 %v684
    %946 = vmatpush.bf16.msra.mxu0 %v680
    %947 = vmatmul.bf16.gmra.mxu0 %v262
    %v948 = vpop.f32.mrf.mxu0
    %v949 = vadd.f32 %v900, %v948
    %v950 = vpop.f32.mrf.mxu0
    %v951 = vadd.f32 %v902, %v950
    %952 = vmatmul.bf16.gmra.mxu0 %v266
    %v953 = vpop.f32.mrf.mxu0
    %v954 = vadd.f32 %v905, %v953
    %v955 = vpop.f32.mrf.mxu0
    %v956 = vadd.f32 %v907, %v955
    %957 = vmatmul.bf16.gmra.mxu0 %v270
    %v958 = vpop.f32.mrf.mxu0
    %v959 = vadd.f32 %v910, %v958
    %v960 = vpop.f32.mrf.mxu0
    %v961 = vadd.f32 %v912, %v960
    %962 = vmatmul.bf16.gmra.mxu0 %v274
    %v963 = vpop.f32.mrf.mxu0
    %v964 = vadd.f32 %v915, %v963
    %v965 = vpop.f32.mrf.mxu0
    %v966 = vadd.f32 %v917, %v965
    %967 = vmatmul.bf16.gmra.mxu0 %v278
    %v968 = vpop.f32.mrf.mxu0
    %v969 = vadd.f32 %v920, %v968
    %v970 = vpop.f32.mrf.mxu0
    %v971 = vadd.f32 %v922, %v970
    %972 = vmatmul.bf16.gmra.mxu0 %v282
    %v973 = vpop.f32.mrf.mxu0
    %v974 = vadd.f32 %v925, %v973
    %v975 = vpop.f32.mrf.mxu0
    %v976 = vadd.f32 %v927, %v975
    %977 = vmatmul.bf16.gmra.mxu0 %v286
    %v978 = vpop.f32.mrf.mxu0
    %v979 = vadd.f32 %v930, %v978
    %v980 = vpop.f32.mrf.mxu0
    %v981 = vadd.f32 %v932, %v980
    %982 = vmatmul.bf16.gmra.mxu0 %v290
    %v983 = vpop.f32.mrf.mxu0
    %v984 = vadd.f32 %v935, %v983
    %v985 = vpop.f32.mrf.mxu0
    %v986 = vadd.f32 %v937, %v985
    %987 = vdwg.mxu0
    %988 = vmatpush.bf16.msra.mxu0 0
    %989 = vmatpush.bf16.msra.mxu0 0
    %990 = vmatpush.bf16.msra.mxu0 0
    %991 = vmatpush.bf16.msra.mxu0 0
    %992 = vmatpush.bf16.msra.mxu0 0
    %993 = vmatpush.bf16.msra.mxu0 0
    %994 = vmatpush.bf16.msra.mxu0 0
    %995 = vmatpush.bf16.msra.mxu0 %v712
    %996 = vmatmul.bf16.gmra.mxu0 %v818
    %v997 = vpop.f32.mrf.mxu0
    %v998 = vadd.f32 %v949, %v997
    %v999 = vpop.f32.mrf.mxu0
    %v1000 = vadd.f32 %v951, %v999
    %1001 = vmatmul.bf16.gmra.mxu0 %v821
    %v1002 = vpop.f32.mrf.mxu0
    %v1003 = vadd.f32 %v954, %v1002
    %v1004 = vpop.f32.mrf.mxu0
    %v1005 = vadd.f32 %v956, %v1004
    %1006 = vmatmul.bf16.gmra.mxu0 %v824
    %v1007 = vpop.f32.mrf.mxu0
    %v1008 = vadd.f32 %v959, %v1007
    %v1009 = vpop.f32.mrf.mxu0
    %v1010 = vadd.f32 %v961, %v1009
    %1011 = vmatmul.bf16.gmra.mxu0 %v827
    %v1012 = vpop.f32.mrf.mxu0
    %v1013 = vadd.f32 %v964, %v1012
    %v1014 = vpop.f32.mrf.mxu0
    %v1015 = vadd.f32 %v966, %v1014
    %1016 = vmatmul.bf16.gmra.mxu0 %v830
    %v1017 = vpop.f32.mrf.mxu0
    %v1018 = vadd.f32 %v969, %v1017
    %v1019 = vpop.f32.mrf.mxu0
    %v1020 = vadd.f32 %v971, %v1019
    %1021 = vmatmul.bf16.gmra.mxu0 %v833
    %v1022 = vpop.f32.mrf.mxu0
    %v1023 = vadd.f32 %v974, %v1022
    %v1024 = vpop.f32.mrf.mxu0
    %v1025 = vadd.f32 %v976, %v1024
    %1026 = vmatmul.bf16.gmra.mxu0 %v836
    %v1027 = vpop.f32.mrf.mxu0
    %v1028 = vadd.f32 %v979, %v1027
    %v1029 = vpop.f32.mrf.mxu0
    %v1030 = vadd.f32 %v981, %v1029
    %1031 = vmatmul.bf16.gmra.mxu0 %v839
    %v1032 = vpop.f32.mrf.mxu0
    %v1033 = vadd.f32 %v984, %v1032
    %v1034 = vpop.f32.mrf.mxu0
    %v1035 = vadd.f32 %v986, %v1034
    %1036 = vdwg.mxu0
    %1037 = vmatpush.bf16.msra.mxu0 %v645
    %1038 = vmatpush.bf16.msra.mxu0 %v641
    %1039 = vmatpush.bf16.msra.mxu0 %v637
    %1040 = vmatpush.bf16.msra.mxu0 %v633
    %1041 = vmatpush.bf16.msra.mxu0 %v629
    %1042 = vmatpush.bf16.msra.mxu0 %v625
    %1043 = vmatpush.bf16.msra.mxu0 %v621
    %1044 = vmatpush.bf16.msra.mxu0 %v617
    %1045 = vmatmul.bf16.gmra.mxu0 %v260
    %v1046 = vpop.f32.mrf.mxu0
    %v1047 = vadd.f32 0.0, %v1046
    %v1048 = vpop.f32.mrf.mxu0
    %v1049 = vadd.f32 0.0, %v1048
    %1050 = vmatmul.bf16.gmra.mxu0 %v264
    %v1051 = vpop.f32.mrf.mxu0
    %v1052 = vadd.f32 0.0, %v1051
    %v1053 = vpop.f32.mrf.mxu0
    %v1054 = vadd.f32 0.0, %v1053
    %1055 = vmatmul.bf16.gmra.mxu0 %v268
    %v1056 = vpop.f32.mrf.mxu0
    %v1057 = vadd.f32 0.0, %v1056
    %v1058 = vpop.f32.mrf.mxu0
    %v1059 = vadd.f32 0.0, %v1058
    %1060 = vmatmul.bf16.gmra.mxu0 %v272
    %v1061 = vpop.f32.mrf.mxu0
    %v1062 = vadd.f32 0.0, %v1061
    %v1063 = vpop.f32.mrf.mxu0
    %v1064 = vadd.f32 0.0, %v1063
    %1065 = vmatmul.bf16.gmra.mxu0 %v276
    %v1066 = vpop.f32.mrf.mxu0
    %v1067 = vadd.f32 0.0, %v1066
    %v1068 = vpop.f32.mrf.mxu0
    %v1069 = vadd.f32 0.0, %v1068
    %1070 = vmatmul.bf16.gmra.mxu0 %v280
    %v1071 = vpop.f32.mrf.mxu0
    %v1072 = vadd.f32 0.0, %v1071
    %v1073 = vpop.f32.mrf.mxu0
    %v1074 = vadd.f32 0.0, %v1073
    %1075 = vmatmul.bf16.gmra.mxu0 %v284
    %v1076 = vpop.f32.mrf.mxu0
    %v1077 = vadd.f32 0.0, %v1076
    %v1078 = vpop.f32.mrf.mxu0
    %v1079 = vadd.f32 0.0, %v1078
    %1080 = vmatmul.bf16.gmra.mxu0 %v288
    %v1081 = vpop.f32.mrf.mxu0
    %v1082 = vadd.f32 0.0, %v1081
    %v1083 = vpop.f32.mrf.mxu0
    %v1084 = vadd.f32 0.0, %v1083
    %1085 = vdwg.mxu0
    %1086 = vmatpush.bf16.msra.mxu0 %v677
    %1087 = vmatpush.bf16.msra.mxu0 %v673
    %1088 = vmatpush.bf16.msra.mxu0 %v669
    %1089 = vmatpush.bf16.msra.mxu0 %v665
    %1090 = vmatpush.bf16.msra.mxu0 %v661
    %1091 = vmatpush.bf16.msra.mxu0 %v657
    %1092 = vmatpush.bf16.msra.mxu0 %v653
    %1093 = vmatpush.bf16.msra.mxu0 %v649
    %1094 = vmatmul.bf16.gmra.mxu0 %v261
    %v1095 = vpop.f32.mrf.mxu0
    %v1096 = vadd.f32 %v1047, %v1095
    %v1097 = vpop.f32.mrf.mxu0
    %v1098 = vadd.f32 %v1049, %v1097
    %1099 = vmatmul.bf16.gmra.mxu0 %v265
    %v1100 = vpop.f32.mrf.mxu0
    %v1101 = vadd.f32 %v1052, %v1100
    %v1102 = vpop.f32.mrf.mxu0
    %v1103 = vadd.f32 %v1054, %v1102
    %1104 = vmatmul.bf16.gmra.mxu0 %v269
    %v1105 = vpop.f32.mrf.mxu0
    %v1106 = vadd.f32 %v1057, %v1105
    %v1107 = vpop.f32.mrf.mxu0
    %v1108 = vadd.f32 %v1059, %v1107
    %1109 = vmatmul.bf16.gmra.mxu0 %v273
    %v1110 = vpop.f32.mrf.mxu0
    %v1111 = vadd.f32 %v1062, %v1110
    %v1112 = vpop.f32.mrf.mxu0
    %v1113 = vadd.f32 %v1064, %v1112
    %1114 = vmatmul.bf16.gmra.mxu0 %v277
    %v1115 = vpop.f32.mrf.mxu0
    %v1116 = vadd.f32 %v1067, %v1115
    %v1117 = vpop.f32.mrf.mxu0
    %v1118 = vadd.f32 %v1069, %v1117
    %1119 = vmatmul.bf16.gmra.mxu0 %v281
    %v1120 = vpop.f32.mrf.mxu0
    %v1121 = vadd.f32 %v1072, %v1120
    %v1122 = vpop.f32.mrf.mxu0
    %v1123 = vadd.f32 %v1074, %v1122
    %1124 = vmatmul.bf16.gmra.mxu0 %v285
    %v1125 = vpop.f32.mrf.mxu0
    %v1126 = vadd.f32 %v1077, %v1125
    %v1127 = vpop.f32.mrf.mxu0
    %v1128 = vadd.f32 %v1079, %v1127
    %1129 = vmatmul.bf16.gmra.mxu0 %v289
    %v1130 = vpop.f32.mrf.mxu0
    %v1131 = vadd.f32 %v1082, %v1130
    %v1132 = vpop.f32.mrf.mxu0
    %v1133 = vadd.f32 %v1084, %v1132
    %1134 = vdwg.mxu0
    %1135 = vmatpush.bf16.msra.mxu0 %v709
    %1136 = vmatpush.bf16.msra.mxu0 %v705
    %1137 = vmatpush.bf16.msra.mxu0 %v701
    %1138 = vmatpush.bf16.msra.mxu0 %v697
    %1139 = vmatpush.bf16.msra.mxu0 %v693
    %1140 = vmatpush.bf16.msra.mxu0 %v689
    %1141 = vmatpush.bf16.msra.mxu0 %v685
    %1142 = vmatpush.bf16.msra.mxu0 %v681
    %1143 = vmatmul.bf16.gmra.mxu0 %v262
    %v1144 = vpop.f32.mrf.mxu0
    %v1145 = vadd.f32 %v1096, %v1144
    %v1146 = vpop.f32.mrf.mxu0
    %v1147 = vadd.f32 %v1098, %v1146
    %1148 = vmatmul.bf16.gmra.mxu0 %v266
    %v1149 = vpop.f32.mrf.mxu0
    %v1150 = vadd.f32 %v1101, %v1149
    %v1151 = vpop.f32.mrf.mxu0
    %v1152 = vadd.f32 %v1103, %v1151
    %1153 = vmatmul.bf16.gmra.mxu0 %v270
    %v1154 = vpop.f32.mrf.mxu0
    %v1155 = vadd.f32 %v1106, %v1154
    %v1156 = vpop.f32.mrf.mxu0
    %v1157 = vadd.f32 %v1108, %v1156
    %1158 = vmatmul.bf16.gmra.mxu0 %v274
    %v1159 = vpop.f32.mrf.mxu0
    %v1160 = vadd.f32 %v1111, %v1159
    %v1161 = vpop.f32.mrf.mxu0
    %v1162 = vadd.f32 %v1113, %v1161
    %1163 = vmatmul.bf16.gmra.mxu0 %v278
    %v1164 = vpop.f32.mrf.mxu0
    %v1165 = vadd.f32 %v1116, %v1164
    %v1166 = vpop.f32.mrf.mxu0
    %v1167 = vadd.f32 %v1118, %v1166
    %1168 = vmatmul.bf16.gmra.mxu0 %v282
    %v1169 = vpop.f32.mrf.mxu0
    %v1170 = vadd.f32 %v1121, %v1169
    %v1171 = vpop.f32.mrf.mxu0
    %v1172 = vadd.f32 %v1123, %v1171
    %1173 = vmatmul.bf16.gmra.mxu0 %v286
    %v1174 = vpop.f32.mrf.mxu0
    %v1175 = vadd.f32 %v1126, %v1174
    %v1176 = vpop.f32.mrf.mxu0
    %v1177 = vadd.f32 %v1128, %v1176
    %1178 = vmatmul.bf16.gmra.mxu0 %v290
    %v1179 = vpop.f32.mrf.mxu0
    %v1180 = vadd.f32 %v1131, %v1179
    %v1181 = vpop.f32.mrf.mxu0
    %v1182 = vadd.f32 %v1133, %v1181
    %1183 = vdwg.mxu0
    %1184 = vmatpush.bf16.msra.mxu0 0
    %1185 = vmatpush.bf16.msra.mxu0 0
    %1186 = vmatpush.bf16.msra.mxu0 0
    %1187 = vmatpush.bf16.msra.mxu0 0
    %1188 = vmatpush.bf16.msra.mxu0 0
    %1189 = vmatpush.bf16.msra.mxu0 0
    %1190 = vmatpush.bf16.msra.mxu0 0
    %1191 = vmatpush.bf16.msra.mxu0 %v713
    %1192 = vmatmul.bf16.gmra.mxu0 %v818
    %v1193 = vpop.f32.mrf.mxu0
    %v1194 = vadd.f32 %v1145, %v1193
    %v1195 = vpop.f32.mrf.mxu0
    %v1196 = vadd.f32 %v1147, %v1195
    %1197 = vmatmul.bf16.gmra.mxu0 %v821
    %v1198 = vpop.f32.mrf.mxu0
    %v1199 = vadd.f32 %v1150, %v1198
    %v1200 = vpop.f32.mrf.mxu0
    %v1201 = vadd.f32 %v1152, %v1200
    %1202 = vmatmul.bf16.gmra.mxu0 %v824
    %v1203 = vpop.f32.mrf.mxu0
    %v1204 = vadd.f32 %v1155, %v1203
    %v1205 = vpop.f32.mrf.mxu0
    %v1206 = vadd.f32 %v1157, %v1205
    %1207 = vmatmul.bf16.gmra.mxu0 %v827
    %v1208 = vpop.f32.mrf.mxu0
    %v1209 = vadd.f32 %v1160, %v1208
    %v1210 = vpop.f32.mrf.mxu0
    %v1211 = vadd.f32 %v1162, %v1210
    %1212 = vmatmul.bf16.gmra.mxu0 %v830
    %v1213 = vpop.f32.mrf.mxu0
    %v1214 = vadd.f32 %v1165, %v1213
    %v1215 = vpop.f32.mrf.mxu0
    %v1216 = vadd.f32 %v1167, %v1215
    %1217 = vmatmul.bf16.gmra.mxu0 %v833
    %v1218 = vpop.f32.mrf.mxu0
    %v1219 = vadd.f32 %v1170, %v1218
    %v1220 = vpop.f32.mrf.mxu0
    %v1221 = vadd.f32 %v1172, %v1220
    %1222 = vmatmul.bf16.gmra.mxu0 %v836
    %v1223 = vpop.f32.mrf.mxu0
    %v1224 = vadd.f32 %v1175, %v1223
    %v1225 = vpop.f32.mrf.mxu0
    %v1226 = vadd.f32 %v1177, %v1225
    %1227 = vmatmul.bf16.gmra.mxu0 %v839
    %v1228 = vpop.f32.mrf.mxu0
    %v1229 = vadd.f32 %v1180, %v1228
    %v1230 = vpop.f32.mrf.mxu0
    %v1231 = vadd.f32 %v1182, %v1230
    %1232 = vdwg.mxu0
    %1233 = vmatpush.bf16.msra.mxu0 %v646
    %1234 = vmatpush.bf16.msra.mxu0 %v642
    %1235 = vmatpush.bf16.msra.mxu0 %v638
    %1236 = vmatpush.bf16.msra.mxu0 %v634
    %1237 = vmatpush.bf16.msra.mxu0 %v630
    %1238 = vmatpush.bf16.msra.mxu0 %v626
    %1239 = vmatpush.bf16.msra.mxu0 %v622
    %1240 = vmatpush.bf16.msra.mxu0 %v618
    %1241 = vmatmul.bf16.gmra.mxu0 %v260
    %v1242 = vpop.f32.mrf.mxu0
    %v1243 = vadd.f32 0.0, %v1242
    %v1244 = vpop.f32.mrf.mxu0
    %v1245 = vadd.f32 0.0, %v1244
    %1246 = vmatmul.bf16.gmra.mxu0 %v264
    %v1247 = vpop.f32.mrf.mxu0
    %v1248 = vadd.f32 0.0, %v1247
    %v1249 = vpop.f32.mrf.mxu0
    %v1250 = vadd.f32 0.0, %v1249
    %1251 = vmatmul.bf16.gmra.mxu0 %v268
    %v1252 = vpop.f32.mrf.mxu0
    %v1253 = vadd.f32 0.0, %v1252
    %v1254 = vpop.f32.mrf.mxu0
    %v1255 = vadd.f32 0.0, %v1254
    %1256 = vmatmul.bf16.gmra.mxu0 %v272
    %v1257 = vpop.f32.mrf.mxu0
    %v1258 = vadd.f32 0.0, %v1257
    %v1259 = vpop.f32.mrf.mxu0
    %v1260 = vadd.f32 0.0, %v1259
    %1261 = vmatmul.bf16.gmra.mxu0 %v276
    %v1262 = vpop.f32.mrf.mxu0
    %v1263 = vadd.f32 0.0, %v1262
    %v1264 = vpop.f32.mrf.mxu0
    %v1265 = vadd.f32 0.0, %v1264
    %1266 = vmatmul.bf16.gmra.mxu0 %v280
    %v1267 = vpop.f32.mrf.mxu0
    %v1268 = vadd.f32 0.0, %v1267
    %v1269 = vpop.f32.mrf.mxu0
    %v1270 = vadd.f32 0.0, %v1269
    %1271 = vmatmul.bf16.gmra.mxu0 %v284
    %v1272 = vpop.f32.mrf.mxu0
    %v1273 = vadd.f32 0.0, %v1272
    %v1274 = vpop.f32.mrf.mxu0
    %v1275 = vadd.f32 0.0, %v1274
    %1276 = vmatmul.bf16.gmra.mxu0 %v288
    %v1277 = vpop.f32.mrf.mxu0
    %v1278 = vadd.f32 0.0, %v1277
    %v1279 = vpop.f32.mrf.mxu0
    %v1280 = vadd.f32 0.0, %v1279
    %1281 = vdwg.mxu0
    %1282 = vmatpush.bf16.msra.mxu0 %v678
    %1283 = vmatpush.bf16.msra.mxu0 %v674
    %1284 = vmatpush.bf16.msra.mxu0 %v670
    %1285 = vmatpush.bf16.msra.mxu0 %v666
    %1286 = vmatpush.bf16.msra.mxu0 %v662
    %1287 = vmatpush.bf16.msra.mxu0 %v658
    %1288 = vmatpush.bf16.msra.mxu0 %v654
    %1289 = vmatpush.bf16.msra.mxu0 %v650
    %1290 = vmatmul.bf16.gmra.mxu0 %v261
    %v1291 = vpop.f32.mrf.mxu0
    %v1292 = vadd.f32 %v1243, %v1291
    %v1293 = vpop.f32.mrf.mxu0
    %v1294 = vadd.f32 %v1245, %v1293
    %1295 = vmatmul.bf16.gmra.mxu0 %v265
    %v1296 = vpop.f32.mrf.mxu0
    %v1297 = vadd.f32 %v1248, %v1296
    %v1298 = vpop.f32.mrf.mxu0
    %v1299 = vadd.f32 %v1250, %v1298
    %1300 = vmatmul.bf16.gmra.mxu0 %v269
    %v1301 = vpop.f32.mrf.mxu0
    %v1302 = vadd.f32 %v1253, %v1301
    %v1303 = vpop.f32.mrf.mxu0
    %v1304 = vadd.f32 %v1255, %v1303
    %1305 = vmatmul.bf16.gmra.mxu0 %v273
    %v1306 = vpop.f32.mrf.mxu0
    %v1307 = vadd.f32 %v1258, %v1306
    %v1308 = vpop.f32.mrf.mxu0
    %v1309 = vadd.f32 %v1260, %v1308
    %1310 = vmatmul.bf16.gmra.mxu0 %v277
    %v1311 = vpop.f32.mrf.mxu0
    %v1312 = vadd.f32 %v1263, %v1311
    %v1313 = vpop.f32.mrf.mxu0
    %v1314 = vadd.f32 %v1265, %v1313
    %1315 = vmatmul.bf16.gmra.mxu0 %v281
    %v1316 = vpop.f32.mrf.mxu0
    %v1317 = vadd.f32 %v1268, %v1316
    %v1318 = vpop.f32.mrf.mxu0
    %v1319 = vadd.f32 %v1270, %v1318
    %1320 = vmatmul.bf16.gmra.mxu0 %v285
    %v1321 = vpop.f32.mrf.mxu0
    %v1322 = vadd.f32 %v1273, %v1321
    %v1323 = vpop.f32.mrf.mxu0
    %v1324 = vadd.f32 %v1275, %v1323
    %1325 = vmatmul.bf16.gmra.mxu0 %v289
    %v1326 = vpop.f32.mrf.mxu0
    %v1327 = vadd.f32 %v1278, %v1326
    %v1328 = vpop.f32.mrf.mxu0
    %v1329 = vadd.f32 %v1280, %v1328
    %1330 = vdwg.mxu0
    %1331 = vmatpush.bf16.msra.mxu0 %v710
    %1332 = vmatpush.bf16.msra.mxu0 %v706
    %1333 = vmatpush.bf16.msra.mxu0 %v702
    %1334 = vmatpush.bf16.msra.mxu0 %v698
    %1335 = vmatpush.bf16.msra.mxu0 %v694
    %1336 = vmatpush.bf16.msra.mxu0 %v690
    %1337 = vmatpush.bf16.msra.mxu0 %v686
    %1338 = vmatpush.bf16.msra.mxu0 %v682
    %1339 = vmatmul.bf16.gmra.mxu0 %v262
    %v1340 = vpop.f32.mrf.mxu0
    %v1341 = vadd.f32 %v1292, %v1340
    %v1342 = vpop.f32.mrf.mxu0
    %v1343 = vadd.f32 %v1294, %v1342
    %1344 = vmatmul.bf16.gmra.mxu0 %v266
    %v1345 = vpop.f32.mrf.mxu0
    %v1346 = vadd.f32 %v1297, %v1345
    %v1347 = vpop.f32.mrf.mxu0
    %v1348 = vadd.f32 %v1299, %v1347
    %1349 = vmatmul.bf16.gmra.mxu0 %v270
    %v1350 = vpop.f32.mrf.mxu0
    %v1351 = vadd.f32 %v1302, %v1350
    %v1352 = vpop.f32.mrf.mxu0
    %v1353 = vadd.f32 %v1304, %v1352
    %1354 = vmatmul.bf16.gmra.mxu0 %v274
    %v1355 = vpop.f32.mrf.mxu0
    %v1356 = vadd.f32 %v1307, %v1355
    %v1357 = vpop.f32.mrf.mxu0
    %v1358 = vadd.f32 %v1309, %v1357
    %1359 = vmatmul.bf16.gmra.mxu0 %v278
    %v1360 = vpop.f32.mrf.mxu0
    %v1361 = vadd.f32 %v1312, %v1360
    %v1362 = vpop.f32.mrf.mxu0
    %v1363 = vadd.f32 %v1314, %v1362
    %1364 = vmatmul.bf16.gmra.mxu0 %v282
    %v1365 = vpop.f32.mrf.mxu0
    %v1366 = vadd.f32 %v1317, %v1365
    %v1367 = vpop.f32.mrf.mxu0
    %v1368 = vadd.f32 %v1319, %v1367
    %1369 = vmatmul.bf16.gmra.mxu0 %v286
    %v1370 = vpop.f32.mrf.mxu0
    %v1371 = vadd.f32 %v1322, %v1370
    %v1372 = vpop.f32.mrf.mxu0
    %v1373 = vadd.f32 %v1324, %v1372
    %1374 = vmatmul.bf16.gmra.mxu0 %v290
    %v1375 = vpop.f32.mrf.mxu0
    %v1376 = vadd.f32 %v1327, %v1375
    %v1377 = vpop.f32.mrf.mxu0
    %v1378 = vadd.f32 %v1329, %v1377
    %1379 = vdwg.mxu0
    %1380 = vmatpush.bf16.msra.mxu0 0
    %1381 = vmatpush.bf16.msra.mxu0 0
    %1382 = vmatpush.bf16.msra.mxu0 0
    %1383 = vmatpush.bf16.msra.mxu0 0
    %1384 = vmatpush.bf16.msra.mxu0 0
    %1385 = vmatpush.bf16.msra.mxu0 0
    %1386 = vmatpush.bf16.msra.mxu0 0
    %1387 = vmatpush.bf16.msra.mxu0 %v714
    %1388 = vmatmul.bf16.gmra.mxu0 %v818
    %v1389 = vpop.f32.mrf.mxu0
    %v1390 = vadd.f32 %v1341, %v1389
    %v1391 = vpop.f32.mrf.mxu0
    %v1392 = vadd.f32 %v1343, %v1391
    %1393 = vmatmul.bf16.gmra.mxu0 %v821
    %v1394 = vpop.f32.mrf.mxu0
    %v1395 = vadd.f32 %v1346, %v1394
    %v1396 = vpop.f32.mrf.mxu0
    %v1397 = vadd.f32 %v1348, %v1396
    %1398 = vmatmul.bf16.gmra.mxu0 %v824
    %v1399 = vpop.f32.mrf.mxu0
    %v1400 = vadd.f32 %v1351, %v1399
    %v1401 = vpop.f32.mrf.mxu0
    %v1402 = vadd.f32 %v1353, %v1401
    %1403 = vmatmul.bf16.gmra.mxu0 %v827
    %v1404 = vpop.f32.mrf.mxu0
    %v1405 = vadd.f32 %v1356, %v1404
    %v1406 = vpop.f32.mrf.mxu0
    %v1407 = vadd.f32 %v1358, %v1406
    %1408 = vmatmul.bf16.gmra.mxu0 %v830
    %v1409 = vpop.f32.mrf.mxu0
    %v1410 = vadd.f32 %v1361, %v1409
    %v1411 = vpop.f32.mrf.mxu0
    %v1412 = vadd.f32 %v1363, %v1411
    %1413 = vmatmul.bf16.gmra.mxu0 %v833
    %v1414 = vpop.f32.mrf.mxu0
    %v1415 = vadd.f32 %v1366, %v1414
    %v1416 = vpop.f32.mrf.mxu0
    %v1417 = vadd.f32 %v1368, %v1416
    %1418 = vmatmul.bf16.gmra.mxu0 %v836
    %v1419 = vpop.f32.mrf.mxu0
    %v1420 = vadd.f32 %v1371, %v1419
    %v1421 = vpop.f32.mrf.mxu0
    %v1422 = vadd.f32 %v1373, %v1421
    %1423 = vmatmul.bf16.gmra.mxu0 %v839
    %v1424 = vpop.f32.mrf.mxu0
    %v1425 = vadd.f32 %v1376, %v1424
    %v1426 = vpop.f32.mrf.mxu0
    %v1427 = vadd.f32 %v1378, %v1426
    %1428 = vdwg.mxu0
    %1429 = vmatpush.bf16.msra.mxu0 %v647
    %1430 = vmatpush.bf16.msra.mxu0 %v643
    %1431 = vmatpush.bf16.msra.mxu0 %v639
    %1432 = vmatpush.bf16.msra.mxu0 %v635
    %1433 = vmatpush.bf16.msra.mxu0 %v631
    %1434 = vmatpush.bf16.msra.mxu0 %v627
    %1435 = vmatpush.bf16.msra.mxu0 %v623
    %1436 = vmatpush.bf16.msra.mxu0 %v619
    %1437 = vmatmul.bf16.gmra.mxu0 %v260
    %v1438 = vpop.f32.mrf.mxu0
    %v1439 = vadd.f32 0.0, %v1438
    %v1440 = vpop.f32.mrf.mxu0
    %v1441 = vadd.f32 0.0, %v1440
    %1442 = vmatmul.bf16.gmra.mxu0 %v264
    %v1443 = vpop.f32.mrf.mxu0
    %v1444 = vadd.f32 0.0, %v1443
    %v1445 = vpop.f32.mrf.mxu0
    %v1446 = vadd.f32 0.0, %v1445
    %1447 = vmatmul.bf16.gmra.mxu0 %v268
    %v1448 = vpop.f32.mrf.mxu0
    %v1449 = vadd.f32 0.0, %v1448
    %v1450 = vpop.f32.mrf.mxu0
    %v1451 = vadd.f32 0.0, %v1450
    %1452 = vmatmul.bf16.gmra.mxu0 %v272
    %v1453 = vpop.f32.mrf.mxu0
    %v1454 = vadd.f32 0.0, %v1453
    %v1455 = vpop.f32.mrf.mxu0
    %v1456 = vadd.f32 0.0, %v1455
    %1457 = vmatmul.bf16.gmra.mxu0 %v276
    %v1458 = vpop.f32.mrf.mxu0
    %v1459 = vadd.f32 0.0, %v1458
    %v1460 = vpop.f32.mrf.mxu0
    %v1461 = vadd.f32 0.0, %v1460
    %1462 = vmatmul.bf16.gmra.mxu0 %v280
    %v1463 = vpop.f32.mrf.mxu0
    %v1464 = vadd.f32 0.0, %v1463
    %v1465 = vpop.f32.mrf.mxu0
    %v1466 = vadd.f32 0.0, %v1465
    %1467 = vmatmul.bf16.gmra.mxu0 %v284
    %v1468 = vpop.f32.mrf.mxu0
    %v1469 = vadd.f32 0.0, %v1468
    %v1470 = vpop.f32.mrf.mxu0
    %v1471 = vadd.f32 0.0, %v1470
    %1472 = vmatmul.bf16.gmra.mxu0 %v288
    %v1473 = vpop.f32.mrf.mxu0
    %v1474 = vadd.f32 0.0, %v1473
    %v1475 = vpop.f32.mrf.mxu0
    %v1476 = vadd.f32 0.0, %v1475
    %1477 = vdwg.mxu0
    %1478 = vmatpush.bf16.msra.mxu0 %v679
    %1479 = vmatpush.bf16.msra.mxu0 %v675
    %1480 = vmatpush.bf16.msra.mxu0 %v671
    %1481 = vmatpush.bf16.msra.mxu0 %v667
    %1482 = vmatpush.bf16.msra.mxu0 %v663
    %1483 = vmatpush.bf16.msra.mxu0 %v659
    %1484 = vmatpush.bf16.msra.mxu0 %v655
    %1485 = vmatpush.bf16.msra.mxu0 %v651
    %1486 = vmatmul.bf16.gmra.mxu0 %v261
    %v1487 = vpop.f32.mrf.mxu0
    %v1488 = vadd.f32 %v1439, %v1487
    %v1489 = vpop.f32.mrf.mxu0
    %v1490 = vadd.f32 %v1441, %v1489
    %1491 = vmatmul.bf16.gmra.mxu0 %v265
    %v1492 = vpop.f32.mrf.mxu0
    %v1493 = vadd.f32 %v1444, %v1492
    %v1494 = vpop.f32.mrf.mxu0
    %v1495 = vadd.f32 %v1446, %v1494
    %1496 = vmatmul.bf16.gmra.mxu0 %v269
    %v1497 = vpop.f32.mrf.mxu0
    %v1498 = vadd.f32 %v1449, %v1497
    %v1499 = vpop.f32.mrf.mxu0
    %v1500 = vadd.f32 %v1451, %v1499
    %1501 = vmatmul.bf16.gmra.mxu0 %v273
    %v1502 = vpop.f32.mrf.mxu0
    %v1503 = vadd.f32 %v1454, %v1502
    %v1504 = vpop.f32.mrf.mxu0
    %v1505 = vadd.f32 %v1456, %v1504
    %1506 = vmatmul.bf16.gmra.mxu0 %v277
    %v1507 = vpop.f32.mrf.mxu0
    %v1508 = vadd.f32 %v1459, %v1507
    %v1509 = vpop.f32.mrf.mxu0
    %v1510 = vadd.f32 %v1461, %v1509
    %1511 = vmatmul.bf16.gmra.mxu0 %v281
    %v1512 = vpop.f32.mrf.mxu0
    %v1513 = vadd.f32 %v1464, %v1512
    %v1514 = vpop.f32.mrf.mxu0
    %v1515 = vadd.f32 %v1466, %v1514
    %1516 = vmatmul.bf16.gmra.mxu0 %v285
    %v1517 = vpop.f32.mrf.mxu0
    %v1518 = vadd.f32 %v1469, %v1517
    %v1519 = vpop.f32.mrf.mxu0
    %v1520 = vadd.f32 %v1471, %v1519
    %1521 = vmatmul.bf16.gmra.mxu0 %v289
    %v1522 = vpop.f32.mrf.mxu0
    %v1523 = vadd.f32 %v1474, %v1522
    %v1524 = vpop.f32.mrf.mxu0
    %v1525 = vadd.f32 %v1476, %v1524
    %1526 = vdwg.mxu0
    %1527 = vmatpush.bf16.msra.mxu0 %v711
    %1528 = vmatpush.bf16.msra.mxu0 %v707
    %1529 = vmatpush.bf16.msra.mxu0 %v703
    %1530 = vmatpush.bf16.msra.mxu0 %v699
    %1531 = vmatpush.bf16.msra.mxu0 %v695
    %1532 = vmatpush.bf16.msra.mxu0 %v691
    %1533 = vmatpush.bf16.msra.mxu0 %v687
    %1534 = vmatpush.bf16.msra.mxu0 %v683
    %1535 = vmatmul.bf16.gmra.mxu0 %v262
    %v1536 = vpop.f32.mrf.mxu0
    %v1537 = vadd.f32 %v1488, %v1536
    %v1538 = vpop.f32.mrf.mxu0
    %v1539 = vadd.f32 %v1490, %v1538
    %1540 = vmatmul.bf16.gmra.mxu0 %v266
    %v1541 = vpop.f32.mrf.mxu0
    %v1542 = vadd.f32 %v1493, %v1541
    %v1543 = vpop.f32.mrf.mxu0
    %v1544 = vadd.f32 %v1495, %v1543
    %1545 = vmatmul.bf16.gmra.mxu0 %v270
    %v1546 = vpop.f32.mrf.mxu0
    %v1547 = vadd.f32 %v1498, %v1546
    %v1548 = vpop.f32.mrf.mxu0
    %v1549 = vadd.f32 %v1500, %v1548
    %1550 = vmatmul.bf16.gmra.mxu0 %v274
    %v1551 = vpop.f32.mrf.mxu0
    %v1552 = vadd.f32 %v1503, %v1551
    %v1553 = vpop.f32.mrf.mxu0
    %v1554 = vadd.f32 %v1505, %v1553
    %1555 = vmatmul.bf16.gmra.mxu0 %v278
    %v1556 = vpop.f32.mrf.mxu0
    %v1557 = vadd.f32 %v1508, %v1556
    %v1558 = vpop.f32.mrf.mxu0
    %v1559 = vadd.f32 %v1510, %v1558
    %1560 = vmatmul.bf16.gmra.mxu0 %v282
    %v1561 = vpop.f32.mrf.mxu0
    %v1562 = vadd.f32 %v1513, %v1561
    %v1563 = vpop.f32.mrf.mxu0
    %v1564 = vadd.f32 %v1515, %v1563
    %1565 = vmatmul.bf16.gmra.mxu0 %v286
    %v1566 = vpop.f32.mrf.mxu0
    %v1567 = vadd.f32 %v1518, %v1566
    %v1568 = vpop.f32.mrf.mxu0
    %v1569 = vadd.f32 %v1520, %v1568
    %1570 = vmatmul.bf16.gmra.mxu0 %v290
    %v1571 = vpop.f32.mrf.mxu0
    %v1572 = vadd.f32 %v1523, %v1571
    %v1573 = vpop.f32.mrf.mxu0
    %v1574 = vadd.f32 %v1525, %v1573
    %1575 = vdwg.mxu0
    %1576 = vmatpush.bf16.msra.mxu0 0
    %1577 = vmatpush.bf16.msra.mxu0 0
    %1578 = vmatpush.bf16.msra.mxu0 0
    %1579 = vmatpush.bf16.msra.mxu0 0
    %1580 = vmatpush.bf16.msra.mxu0 0
    %1581 = vmatpush.bf16.msra.mxu0 0
    %1582 = vmatpush.bf16.msra.mxu0 0
    %1583 = vmatpush.bf16.msra.mxu0 %v715
    %1584 = vmatmul.bf16.gmra.mxu0 %v818
    %v1585 = vpop.f32.mrf.mxu0
    %v1586 = vadd.f32 %v1537, %v1585
    %v1587 = vpop.f32.mrf.mxu0
    %v1588 = vadd.f32 %v1539, %v1587
    %1589 = vmatmul.bf16.gmra.mxu0 %v821
    %v1590 = vpop.f32.mrf.mxu0
    %v1591 = vadd.f32 %v1542, %v1590
    %v1592 = vpop.f32.mrf.mxu0
    %v1593 = vadd.f32 %v1544, %v1592
    %1594 = vmatmul.bf16.gmra.mxu0 %v824
    %v1595 = vpop.f32.mrf.mxu0
    %v1596 = vadd.f32 %v1547, %v1595
    %v1597 = vpop.f32.mrf.mxu0
    %v1598 = vadd.f32 %v1549, %v1597
    %1599 = vmatmul.bf16.gmra.mxu0 %v827
    %v1600 = vpop.f32.mrf.mxu0
    %v1601 = vadd.f32 %v1552, %v1600
    %v1602 = vpop.f32.mrf.mxu0
    %v1603 = vadd.f32 %v1554, %v1602
    %1604 = vmatmul.bf16.gmra.mxu0 %v830
    %v1605 = vpop.f32.mrf.mxu0
    %v1606 = vadd.f32 %v1557, %v1605
    %v1607 = vpop.f32.mrf.mxu0
    %v1608 = vadd.f32 %v1559, %v1607
    %1609 = vmatmul.bf16.gmra.mxu0 %v833
    %v1610 = vpop.f32.mrf.mxu0
    %v1611 = vadd.f32 %v1562, %v1610
    %v1612 = vpop.f32.mrf.mxu0
    %v1613 = vadd.f32 %v1564, %v1612
    %1614 = vmatmul.bf16.gmra.mxu0 %v836
    %v1615 = vpop.f32.mrf.mxu0
    %v1616 = vadd.f32 %v1567, %v1615
    %v1617 = vpop.f32.mrf.mxu0
    %v1618 = vadd.f32 %v1569, %v1617
    %1619 = vmatmul.bf16.gmra.mxu0 %v839
    %v1620 = vpop.f32.mrf.mxu0
    %v1621 = vadd.f32 %v1572, %v1620
    %v1622 = vpop.f32.mrf.mxu0
    %v1623 = vadd.f32 %v1574, %v1622
    %1624 = vdwg.mxu0
    %v1625 = vmul.f32 %v998, %v998
    %v1626 = vmul.f32 %v1194, %v1194
    %v1627 = vmul.f32 %v1000, %v1000
    %v1628 = vmul.f32 %v1196, %v1196
    %v1629 = vmul.f32 %v1003, %v1003
    %v1630 = vmul.f32 %v1199, %v1199
    %v1631 = vmul.f32 %v1005, %v1005
    %v1632 = vmul.f32 %v1201, %v1201
    %v1633 = vmul.f32 %v1008, %v1008
    %v1634 = vmul.f32 %v1204, %v1204
    %v1635 = vmul.f32 %v1010, %v1010
    %v1636 = vmul.f32 %v1206, %v1206
    %v1637 = vmul.f32 %v1013, %v1013
    %v1638 = vmul.f32 %v1209, %v1209
    %v1639 = vmul.f32 %v1015, %v1015
    %v1640 = vmul.f32 %v1211, %v1211
    %v1641 = vmul.f32 %v1018, %v1018
    %v1642 = vmul.f32 %v1214, %v1214
    %v1643 = vmul.f32 %v1020, %v1020
    %v1644 = vmul.f32 %v1216, %v1216
    %v1645 = vmul.f32 %v1023, %v1023
    %v1646 = vmul.f32 %v1219, %v1219
    %v1647 = vmul.f32 %v1025, %v1025
    %v1648 = vmul.f32 %v1221, %v1221
    %v1649 = vmul.f32 %v1028, %v1028
    %v1650 = vmul.f32 %v1224, %v1224
    %v1651 = vmul.f32 %v1030, %v1030
    %v1652 = vmul.f32 %v1226, %v1226
    %v1653 = vmul.f32 %v1033, %v1033
    %v1654 = vmul.f32 %v1229, %v1229
    %v1655 = vmul.f32 %v1035, %v1035
    %v1656 = vmul.f32 %v1231, %v1231
    %v1657 = vmul.f32 %v1390, %v1390
    %v1658 = vmul.f32 %v1586, %v1586
    %v1659 = vmul.f32 %v1392, %v1392
    %v1660 = vmul.f32 %v1588, %v1588
    %v1661 = vmul.f32 %v1395, %v1395
    %v1662 = vmul.f32 %v1591, %v1591
    %v1663 = vmul.f32 %v1397, %v1397
    %v1664 = vmul.f32 %v1593, %v1593
    %v1665 = vmul.f32 %v1400, %v1400
    %v1666 = vmul.f32 %v1596, %v1596
    %v1667 = vmul.f32 %v1402, %v1402
    %v1668 = vmul.f32 %v1598, %v1598
    %v1669 = vmul.f32 %v1405, %v1405
    %v1670 = vmul.f32 %v1601, %v1601
    %v1671 = vmul.f32 %v1407, %v1407
    %v1672 = vmul.f32 %v1603, %v1603
    %v1673 = vmul.f32 %v1410, %v1410
    %v1674 = vmul.f32 %v1606, %v1606
    %v1675 = vmul.f32 %v1412, %v1412
    %v1676 = vmul.f32 %v1608, %v1608
    %v1677 = vmul.f32 %v1415, %v1415
    %v1678 = vmul.f32 %v1611, %v1611
    %v1679 = vmul.f32 %v1417, %v1417
    %v1680 = vmul.f32 %v1613, %v1613
    %v1681 = vmul.f32 %v1420, %v1420
    %v1682 = vmul.f32 %v1616, %v1616
    %v1683 = vmul.f32 %v1422, %v1422
    %v1684 = vmul.f32 %v1618, %v1618
    %v1685 = vmul.f32 %v1425, %v1425
    %v1686 = vmul.f32 %v1621, %v1621
    %v1687 = vmul.f32 %v1427, %v1427
    %v1688 = vmul.f32 %v1623, %v1623
    %v1689 = vadd.f32 %v1625, %v1657
    %v1690 = vadd.f32 %v1626, %v1658
    %v1691 = vadd.f32 %v1627, %v1659
    %v1692 = vadd.f32 %v1628, %v1660
    %v1693 = vadd.f32 %v1629, %v1661
    %v1694 = vadd.f32 %v1630, %v1662
    %v1695 = vadd.f32 %v1631, %v1663
    %v1696 = vadd.f32 %v1632, %v1664
    %v1697 = vadd.f32 %v1633, %v1665
    %v1698 = vadd.f32 %v1634, %v1666
    %v1699 = vadd.f32 %v1635, %v1667
    %v1700 = vadd.f32 %v1636, %v1668
    %v1701 = vadd.f32 %v1637, %v1669
    %v1702 = vadd.f32 %v1638, %v1670
    %v1703 = vadd.f32 %v1639, %v1671
    %v1704 = vadd.f32 %v1640, %v1672
    %v1705 = vadd.f32 %v1641, %v1673
    %v1706 = vadd.f32 %v1642, %v1674
    %v1707 = vadd.f32 %v1643, %v1675
    %v1708 = vadd.f32 %v1644, %v1676
    %v1709 = vadd.f32 %v1645, %v1677
    %v1710 = vadd.f32 %v1646, %v1678
    %v1711 = vadd.f32 %v1647, %v1679
    %v1712 = vadd.f32 %v1648, %v1680
    %v1713 = vadd.f32 %v1649, %v1681
    %v1714 = vadd.f32 %v1650, %v1682
    %v1715 = vadd.f32 %v1651, %v1683
    %v1716 = vadd.f32 %v1652, %v1684
    %v1717 = vadd.f32 %v1653, %v1685
    %v1718 = vadd.f32 %v1654, %v1686
    %v1719 = vadd.f32 %v1655, %v1687
    %v1720 = vadd.f32 %v1656, %v1688
    %v1721 = vpack.c.bf16 %v1691, %v1689
    %v1722 = vpack.c.bf16 %v1692, %v1690
    %v1723 = vpack.c.bf16 %v1695, %v1693
    %v1724 = vpack.c.bf16 %v1696, %v1694
    %v1725 = vpack.c.bf16 %v1699, %v1697
    %v1726 = vpack.c.bf16 %v1700, %v1698
    %v1727 = vpack.c.bf16 %v1703, %v1701
    %v1728 = vpack.c.bf16 %v1704, %v1702
    %v1729 = vpack.c.bf16 %v1707, %v1705
    %v1730 = vpack.c.bf16 %v1708, %v1706
    %v1731 = vpack.c.bf16 %v1711, %v1709
    %v1732 = vpack.c.bf16 %v1712, %v1710
    %v1733 = vpack.c.bf16 %v1715, %v1713
    %v1734 = vpack.c.bf16 %v1716, %v1714
    %v1735 = vpack.c.bf16 %v1719, %v1717
    %v1736 = vpack.c.bf16 %v1720, %v1718
    %v1737 = vld [vmem:[%s2] sm:$0xf]
    %v1738 = vld [vmem:[%s2 + $0x4] sm:$0xf]
    %v1739 = vld [vmem:[%s2 + $0x8] sm:$0xf]
    %v1740 = vld [vmem:[%s2 + $0xc] sm:$0xf]
    %v1741 = vld [vmem:[%s2 + $0x10] sm:$0xf]
    %v1742 = vld [vmem:[%s2 + $0x14] sm:$0xf]
    %v1743 = vld [vmem:[%s2 + $0x18] sm:$0xf]
    %v1744 = vld [vmem:[%s2 + $0x1c] sm:$0xf]
    %v1745 = vld [vmem:[%s2 + $0x20] sm:$0xf]
    %v1746 = vld [vmem:[%s2 + $0x24] sm:$0xf]
    %v1747 = vld [vmem:[%s2 + $0x28] sm:$0xf]
    %v1748 = vld [vmem:[%s2 + $0x2c] sm:$0xf]
    %v1749 = vld [vmem:[%s2 + $0x30] sm:$0xf]
    %v1750 = vld [vmem:[%s2 + $0x34] sm:$0xf]
    %v1751 = vld [vmem:[%s2 + $0x38] sm:$0xf]
    %v1752 = vld [vmem:[%s2 + $0x3c] sm:$0xf]
    %v1753 = vld [vmem:[%s2 + $0x40] sm:$0xf]
    %v1754 = vld [vmem:[%s2 + $0x44] sm:$0xf]
    %v1755 = vld [vmem:[%s2 + $0x48] sm:$0xf]
    %v1756 = vld [vmem:[%s2 + $0x4c] sm:$0xf]
    %v1757 = vld [vmem:[%s2 + $0x50] sm:$0xf]
    %v1758 = vld [vmem:[%s2 + $0x54] sm:$0xf]
    %v1759 = vld [vmem:[%s2 + $0x58] sm:$0xf]
    %v1760 = vld [vmem:[%s2 + $0x5c] sm:$0xf]
    %v1761 = vld [vmem:[%s2 + $0x60] sm:$0xf]
    %v1762 = vld [vmem:[%s2 + $0x64] sm:$0xf]
    %v1763 = vld [vmem:[%s2 + $0x68] sm:$0xf]
    %v1764 = vld [vmem:[%s2 + $0x6c] sm:$0xf]
    %v1765 = vld [vmem:[%s2 + $0x70] sm:$0xf]
    %v1766 = vld [vmem:[%s2 + $0x74] sm:$0xf]
    %v1767 = vld [vmem:[%s2 + $0x78] sm:$0xf]
    %v1768 = vld [vmem:[%s2 + $0x7c] sm:$0xf]
    %v1801 = vunpack.c.l.b16 %v1737
    %v1802 = vunpack.c.l.b16 %v1738
    %v1803 = vunpack.c.l.b16 %v1739
    %v1804 = vunpack.c.l.b16 %v1740
    %v1805 = vunpack.c.l.b16 %v1741
    %v1806 = vunpack.c.l.b16 %v1742
    %v1807 = vunpack.c.l.b16 %v1743
    %v1808 = vunpack.c.l.b16 %v1744
    %v1809 = vunpack.c.l.b16 %v1745
    %v1810 = vunpack.c.l.b16 %v1746
    %v1811 = vunpack.c.l.b16 %v1747
    %v1812 = vunpack.c.l.b16 %v1748
    %v1813 = vunpack.c.l.b16 %v1749
    %v1814 = vunpack.c.l.b16 %v1750
    %v1815 = vunpack.c.l.b16 %v1751
    %v1816 = vunpack.c.l.b16 %v1752
    %v1817 = vunpack.c.l.b16 %v1753
    %v1818 = vunpack.c.l.b16 %v1754
    %v1819 = vunpack.c.l.b16 %v1755
    %v1820 = vunpack.c.l.b16 %v1756
    %v1821 = vunpack.c.l.b16 %v1757
    %v1822 = vunpack.c.l.b16 %v1758
    %v1823 = vunpack.c.l.b16 %v1759
    %v1824 = vunpack.c.l.b16 %v1760
    %v1825 = vunpack.c.l.b16 %v1761
    %v1826 = vunpack.c.l.b16 %v1762
    %v1827 = vunpack.c.l.b16 %v1763
    %v1828 = vunpack.c.l.b16 %v1764
    %v1829 = vunpack.c.l.b16 %v1765
    %v1830 = vunpack.c.l.b16 %v1766
    %v1831 = vunpack.c.l.b16 %v1767
    %v1832 = vunpack.c.l.b16 %v1768
    %v1833 = vpack.c.b16 %v1802, %v1801
    %v1834 = vpack.c.b16 %v1804, %v1803
    %v1835 = vpack.c.b16 %v1806, %v1805
    %v1836 = vpack.c.b16 %v1808, %v1807
    %v1837 = vpack.c.b16 %v1810, %v1809
    %v1838 = vpack.c.b16 %v1812, %v1811
    %v1839 = vpack.c.b16 %v1814, %v1813
    %v1840 = vpack.c.b16 %v1816, %v1815
    %v1841 = vpack.c.b16 %v1818, %v1817
    %v1842 = vpack.c.b16 %v1820, %v1819
    %v1843 = vpack.c.b16 %v1822, %v1821
    %v1844 = vpack.c.b16 %v1824, %v1823
    %v1845 = vpack.c.b16 %v1826, %v1825
    %v1846 = vpack.c.b16 %v1828, %v1827
    %v1847 = vpack.c.b16 %v1830, %v1829
    %v1848 = vpack.c.b16 %v1832, %v1831
    %1865 = vmatpush.bf16.msra.mxu0 %v1840
    %1866 = vmatpush.bf16.msra.mxu0 %v1839
    %1867 = vmatpush.bf16.msra.mxu0 %v1838
    %1868 = vmatpush.bf16.msra.mxu0 %v1837
    %1869 = vmatpush.bf16.msra.mxu0 %v1836
    %1870 = vmatpush.bf16.msra.mxu0 %v1835
    %1871 = vmatpush.bf16.msra.mxu0 %v1834
    %1872 = vmatpush.bf16.msra.mxu0 %v1833
    %1873 = vmatmul.bf16.gmra.mxu0 %v1721
    %v1874 = vpop.f32.mrf.mxu0
    %v1875 = vadd.f32 0.0, %v1874
    %v1876 = vpop.f32.mrf.mxu0
    %v1877 = vadd.f32 0.0, %v1876
    %1878 = vmatmul.bf16.gmra.mxu0 %v1723
    %v1879 = vpop.f32.mrf.mxu0
    %v1880 = vadd.f32 0.0, %v1879
    %v1881 = vpop.f32.mrf.mxu0
    %v1882 = vadd.f32 0.0, %v1881
    %1883 = vmatmul.bf16.gmra.mxu0 %v1725
    %v1884 = vpop.f32.mrf.mxu0
    %v1885 = vadd.f32 0.0, %v1884
    %v1886 = vpop.f32.mrf.mxu0
    %v1887 = vadd.f32 0.0, %v1886
    %1888 = vmatmul.bf16.gmra.mxu0 %v1727
    %v1889 = vpop.f32.mrf.mxu0
    %v1890 = vadd.f32 0.0, %v1889
    %v1891 = vpop.f32.mrf.mxu0
    %v1892 = vadd.f32 0.0, %v1891
    %1893 = vmatmul.bf16.gmra.mxu0 %v1729
    %v1894 = vpop.f32.mrf.mxu0
    %v1895 = vadd.f32 0.0, %v1894
    %v1896 = vpop.f32.mrf.mxu0
    %v1897 = vadd.f32 0.0, %v1896
    %1898 = vmatmul.bf16.gmra.mxu0 %v1731
    %v1899 = vpop.f32.mrf.mxu0
    %v1900 = vadd.f32 0.0, %v1899
    %v1901 = vpop.f32.mrf.mxu0
    %v1902 = vadd.f32 0.0, %v1901
    %1903 = vmatmul.bf16.gmra.mxu0 %v1733
    %v1904 = vpop.f32.mrf.mxu0
    %v1905 = vadd.f32 0.0, %v1904
    %v1906 = vpop.f32.mrf.mxu0
    %v1907 = vadd.f32 0.0, %v1906
    %1908 = vmatmul.bf16.gmra.mxu0 %v1735
    %v1909 = vpop.f32.mrf.mxu0
    %v1910 = vadd.f32 0.0, %v1909
    %v1911 = vpop.f32.mrf.mxu0
    %v1912 = vadd.f32 0.0, %v1911
    %1913 = vdwg.mxu0
    %1914 = vmatpush.bf16.msra.mxu0 %v1848
    %1915 = vmatpush.bf16.msra.mxu0 %v1847
    %1916 = vmatpush.bf16.msra.mxu0 %v1846
    %1917 = vmatpush.bf16.msra.mxu0 %v1845
    %1918 = vmatpush.bf16.msra.mxu0 %v1844
    %1919 = vmatpush.bf16.msra.mxu0 %v1843
    %1920 = vmatpush.bf16.msra.mxu0 %v1842
    %1921 = vmatpush.bf16.msra.mxu0 %v1841
    %1922 = vmatmul.bf16.gmra.mxu0 %v1722
    %v1923 = vpop.f32.mrf.mxu0
    %v1924 = vadd.f32 %v1875, %v1923
    %v1925 = vpop.f32.mrf.mxu0
    %v1926 = vadd.f32 %v1877, %v1925
    %1927 = vmatmul.bf16.gmra.mxu0 %v1724
    %v1928 = vpop.f32.mrf.mxu0
    %v1929 = vadd.f32 %v1880, %v1928
    %v1930 = vpop.f32.mrf.mxu0
    %v1931 = vadd.f32 %v1882, %v1930
    %1932 = vmatmul.bf16.gmra.mxu0 %v1726
    %v1933 = vpop.f32.mrf.mxu0
    %v1934 = vadd.f32 %v1885, %v1933
    %v1935 = vpop.f32.mrf.mxu0
    %v1936 = vadd.f32 %v1887, %v1935
    %1937 = vmatmul.bf16.gmra.mxu0 %v1728
    %v1938 = vpop.f32.mrf.mxu0
    %v1939 = vadd.f32 %v1890, %v1938
    %v1940 = vpop.f32.mrf.mxu0
    %v1941 = vadd.f32 %v1892, %v1940
    %1942 = vmatmul.bf16.gmra.mxu0 %v1730
    %v1943 = vpop.f32.mrf.mxu0
    %v1944 = vadd.f32 %v1895, %v1943
    %v1945 = vpop.f32.mrf.mxu0
    %v1946 = vadd.f32 %v1897, %v1945
    %1947 = vmatmul.bf16.gmra.mxu0 %v1732
    %v1948 = vpop.f32.mrf.mxu0
    %v1949 = vadd.f32 %v1900, %v1948
    %v1950 = vpop.f32.mrf.mxu0
    %v1951 = vadd.f32 %v1902, %v1950
    %1952 = vmatmul.bf16.gmra.mxu0 %v1734
    %v1953 = vpop.f32.mrf.mxu0
    %v1954 = vadd.f32 %v1905, %v1953
    %v1955 = vpop.f32.mrf.mxu0
    %v1956 = vadd.f32 %v1907, %v1955
    %1957 = vmatmul.bf16.gmra.mxu0 %v1736
    %v1958 = vpop.f32.mrf.mxu0
    %v1959 = vadd.f32 %v1910, %v1958
    %v1960 = vpop.f32.mrf.mxu0
    %v1961 = vadd.f32 %v1912, %v1960
    %1962 = vdwg.mxu0
    %v1963 = vmax.f32 %v1924, 1.1920929e-07
    %v1964 = vmax.f32 %v1926, 1.1920929e-07
    %v1965 = vmax.f32 %v1929, 1.1920929e-07
    %v1966 = vmax.f32 %v1931, 1.1920929e-07
    %v1967 = vmax.f32 %v1934, 1.1920929e-07
    %v1968 = vmax.f32 %v1936, 1.1920929e-07
    %v1969 = vmax.f32 %v1939, 1.1920929e-07
    %v1970 = vmax.f32 %v1941, 1.1920929e-07
    %v1971 = vmax.f32 %v1944, 1.1920929e-07
    %v1972 = vmax.f32 %v1946, 1.1920929e-07
    %v1973 = vmax.f32 %v1949, 1.1920929e-07
    %v1974 = vmax.f32 %v1951, 1.1920929e-07
    %v1975 = vmax.f32 %v1954, 1.1920929e-07
    %v1976 = vmax.f32 %v1956, 1.1920929e-07
    %v1977 = vmax.f32 %v1959, 1.1920929e-07
    %v1978 = vmax.f32 %v1961, 1.1920929e-07
    %v1979 = vlog2.pop %v1963
    %v1980 = vmul.f32 %v1979, 0.6931472
    %v1981 = vlog2.pop %v1964
    %v1982 = vmul.f32 %v1981, 0.6931472
    %v1983 = vlog2.pop %v1965
    %v1984 = vmul.f32 %v1983, 0.6931472
    %v1985 = vlog2.pop %v1966
    %v1986 = vmul.f32 %v1985, 0.6931472
    %v1987 = vlog2.pop %v1967
    %v1988 = vmul.f32 %v1987, 0.6931472
    %v1989 = vlog2.pop %v1968
    %v1990 = vmul.f32 %v1989, 0.6931472
    %v1991 = vlog2.pop %v1969
    %v1992 = vmul.f32 %v1991, 0.6931472
    %v1993 = vlog2.pop %v1970
    %v1994 = vmul.f32 %v1993, 0.6931472
    %v1995 = vlog2.pop %v1971
    %v1996 = vmul.f32 %v1995, 0.6931472
    %v1997 = vlog2.pop %v1972
    %v1998 = vmul.f32 %v1997, 0.6931472
    %v1999 = vlog2.pop %v1973
    %v2000 = vmul.f32 %v1999, 0.6931472
    %v2001 = vlog2.pop %v1974
    %v2002 = vmul.f32 %v2001, 0.6931472
    %v2003 = vlog2.pop %v1975
    %v2004 = vmul.f32 %v2003, 0.6931472
    %v2005 = vlog2.pop %v1976
    %v2006 = vmul.f32 %v2005, 0.6931472
    %v2007 = vlog2.pop %v1977
    %v2008 = vmul.f32 %v2007, 0.6931472
    %v2009 = vlog2.pop %v1978
    %v2010 = vmul.f32 %v2009, 0.6931472
    %2011 = vst [vmem:[#allocation5] sm:$0xff] %v1980
    %2012 = vst [vmem:[#allocation5 + $0x8] sm:$0xff] %v1982
    %2013 = vst [vmem:[#allocation5 + $0x10] sm:$0xff] %v1984
    %2014 = vst [vmem:[#allocation5 + $0x18] sm:$0xff] %v1986
    %2015 = vst [vmem:[#allocation5 + $0x20] sm:$0xff] %v1988
    %2016 = vst [vmem:[#allocation5 + $0x28] sm:$0xff] %v1990
    %2017 = vst [vmem:[#allocation5 + $0x30] sm:$0xff] %v1992
    %2018 = vst [vmem:[#allocation5 + $0x38] sm:$0xff] %v1994
    %2019 = vst [vmem:[#allocation5 + $0x40] sm:$0xff] %v1996
    %2020 = vst [vmem:[#allocation5 + $0x48] sm:$0xff] %v1998
    %2021 = vst [vmem:[#allocation5 + $0x50] sm:$0xff] %v2000
    %2022 = vst [vmem:[#allocation5 + $0x58] sm:$0xff] %v2002
    %2023 = vst [vmem:[#allocation5 + $0x60] sm:$0xff] %v2004
    %2024 = vst [vmem:[#allocation5 + $0x68] sm:$0xff] %v2006
    %2025 = vst [vmem:[#allocation5 + $0x70] sm:$0xff] %v2008
    %2026 = vst [vmem:[#allocation5 + $0x78] sm:$0xff] %v2010
    // Predicated region
    $region18: #{tpu_custom_call.1} parent=1 // pred_check
      _
    $region19: #{tpu_custom_call.1} parent=1 // pred_check_branch
      %2028 = sbr.rel (0) target = $region21
    $region20: #{tpu_custom_call.1} parent=1 // pred_region
      %2030 = vsyncadd [#allocation4], 0
      %s2031 = sshll.u32 [#allocation5], 4
      %s2032 = int_to_ptr.vmem [resolvable:$true] %s2031
      %s2033 = sshll.u32 %s3, 4
      %s2034 = int_to_ptr.hbm [resolvable:$true] %s2033
      %2039 = dma.vmem_to_hbm [thread:$0]  %s2032, 2048, %s2034, [#allocation4], 128, 128, 8
    $region21: #{tpu_custom_call.1} parent=1 // pred_fallthru
      _
    // Predicated region
    $region22: #{tpu_custom_call.1} parent=1 // pred_check
      _
    $region23: #{tpu_custom_call.1} parent=1 // pred_check_branch
      %2041 = sbr.rel (0) target = $region25
    $region24: #{tpu_custom_call.1} parent=1 // pred_region
      %2043 = dma.done [#allocation4], 2048
    $region25: #{tpu_custom_call.1} parent=1 // pred_fallthru
      _
    %2044 = vsyncpa [#allocation3], 1
    %2045 = vsyncpa [#allocation4], 1

</llo_original>
